<compile_context>
chip_gen: v5e
topology: v5e:2x2
jax: 0.10.0
libtpu: 0.0.40
codegen_flags: <defaults>
</compile_context>

<pallas_src>
import jax
import jax.numpy as jnp
from jax.experimental import pallas as pl
from jax.experimental.pallas import tpu as pltpu

# ----------------------------- scaled-down config -----------------------------
STEM_CH = 8
LAYER_WIDTHS = (8, 16, 32, 64)       # resnet101: (64, 128, 256, 512)
BLOCKS = (2, 1, 1, 1)                # resnet101: (3, 4, 23, 3)
EXPANSION = 4
NUM_CLASSES = 10                     # module default is 1000; scaled down
NUM_CONDS = 2
BN_EPS = 1e-5

LANE = 128                           # TPU lane width; channels padded to this


def _round_up(v, m):
    return ((v + m - 1) // m) * m


def _pad_axis(x, axis, mult=LANE):
    size = x.shape[axis]
    tgt = _round_up(size, mult)
    if tgt == size:
        return x
    pads = [(0, 0)] * x.ndim
    pads[axis] = (0, tgt - size)
    return jnp.pad(x, pads)


def _vmem_limit_bytes():
    # Generation-aware scoped-VMEM budget (v5e/v6e: 128 MiB physical, v7x: 64 MiB).
    try:
        cap = pltpu.get_tpu_info().vmem_capacity_bytes
        return int(min(max(cap * 3 // 4, 32 * 1024 * 1024), 96 * 1024 * 1024))
    except Exception:
        return 64 * 1024 * 1024


VMEM_LIMIT = _vmem_limit_bytes()


def _cparams(*sem):
    return pltpu.CompilerParams(dimension_semantics=sem,
                                vmem_limit_bytes=VMEM_LIMIT)


# =============================== Pallas kernels ===============================
#
# ---- tiled matmul (optionally with fused per-channel BN statistics) ----------


def _matmul_kernel(a_ref, b_ref, o_ref, acc_ref):
    @pl.when(pl.program_id(2) == 0)
    def _init():
        acc_ref[...] = jnp.zeros_like(acc_ref)

    acc_ref[...] += jnp.dot(a_ref[...], b_ref[...],
                            preferred_element_type=jnp.float32)

    @pl.when(pl.program_id(2) == pl.num_programs(2) - 1)
    def _store():
        o_ref[...] = acc_ref[...].astype(o_ref.dtype)


def _matmul_stats_kernel(a_ref, b_ref, o_ref, stats_ref, acc_ref):
    i = pl.program_id(1)             # M-tile index
    k = pl.program_id(2)             # K-tile index
    k_last = pl.num_programs(2) - 1

    @pl.when(k == 0)
    def _init():
        acc_ref[...] = jnp.zeros_like(acc_ref)

    acc_ref[...] += jnp.dot(a_ref[...], b_ref[...],
                            preferred_element_type=jnp.float32)

    @pl.when((k == k_last) & (i == 0))
    def _init_stats():
        stats_ref[...] = jnp.zeros_like(stats_ref)

    @pl.when(k == k_last)
    def _store():
        acc = acc_ref[...]
        o_ref[...] = acc.astype(o_ref.dtype)
        # fused BN statistics: padded M rows are zero so they contribute nothing
        stats_ref[0:1, :] += jnp.sum(acc, axis=0, keepdims=True)
        stats_ref[1:2, :] += jnp.sum(acc * acc, axis=0, keepdims=True)


def pallas_matmul(a, b, out_dtype=jnp.bfloat16, with_stats=False):
    """(M, K) @ (K, N). bf16 MXU operands, f32 accumulation, tiled grid.
    When with_stats, also returns an (8, N) f32 block: row0 = sum, row1 = sumsq."""
    M, K = a.shape
    K2, N = b.shape
    assert K == K2
    a = a.astype(jnp.bfloat16)
    b = b.astype(jnp.bfloat16)

    tm = min(512, _round_up(M, 8))
    Mp = _round_up(M, tm)
    if Mp != M:
        a = jnp.pad(a, ((0, Mp - M), (0, 0)))
    if N % 256 == 0:
        tn = 256
    elif N % 128 == 0:
        tn = 128
    else:
        tn = N
    if K <= 512:
        tk = K
    elif K % 512 == 0:
        tk = 512
    elif K % 256 == 0:
        tk = 256
    elif K % 128 == 0:
        tk = 128
    else:
        tk = K

    grid = (N // tn, Mp // tm, K // tk)          # (j, i, k): stats revisits are inner
    a_spec = pl.BlockSpec((tm, tk), lambda j, i, k: (i, k))
    b_spec = pl.BlockSpec((tk, tn), lambda j, i, k: (k, j))
    o_spec = pl.BlockSpec((tm, tn), lambda j, i, k: (i, j))
    scratch = [pltpu.VMEM((tm, tn), jnp.float32)]

    if with_stats:
        out, stats = pl.pallas_call(
            _matmul_stats_kernel,
            out_shape=(jax.ShapeDtypeStruct((Mp, N), out_dtype),
                       jax.ShapeDtypeStruct((8, N), jnp.float32)),
            grid=grid,
            in_specs=[a_spec, b_spec],
            out_specs=(o_spec, pl.BlockSpec((8, tn), lambda j, i, k: (0, j))),
            scratch_shapes=scratch,
            compiler_params=_cparams("parallel", "arbitrary", "arbitrary"),
        )(a, b)
        return (out[:M] if Mp != M else out), stats

    out = pl.pallas_call(
        _matmul_kernel,
        out_shape=jax.ShapeDtypeStruct((Mp, N), out_dtype),
        grid=grid,
        in_specs=[a_spec, b_spec],
        out_specs=o_spec,
        scratch_shapes=scratch,
        compiler_params=_cparams("parallel", "parallel", "arbitrary"),
    )(a, b)
    return out[:M] if Mp != M else out


# ---- KxK conv: in-kernel padding + stride-phase split, fused BN statistics ---


def _make_conv_kxk_kernel(H, Wd, kh, kw, stride, pad, cinp, coutp, Ho, Wo, wq):
    """Generates a per-sample conv kernel.  The input block is the raw NHWC map
    (last two dims reshaped to (W//stride, stride*cinp) so column phases are clean
    lane slices).  The kernel builds the zero-padded stride-phase image in VMEM,
    runs kh*kw shifted matmuls into a VMEM f32 accumulator, then stores the exact
    (Ho, Wo) output in bf16 and accumulates per-channel sum / sumsq."""
    used_pi = {dy % stride for dy in range(kh)}
    used_pj = {dx % stride for dx in range(kw)}
    rows = Ho * wq

    def kernel(x_ref, w_ref, o_ref, stats_ref, pbuf_ref, acc_ref):
        # zero the phase buffers (this is the spatial zero padding)
        pbuf_ref[...] = jnp.zeros_like(pbuf_ref)
        # copy the input into the phase-split padded layout (all static slices)
        for r in range(H):
            pi = (r + pad) % stride
            if pi not in used_pi:
                continue
            a = (r + pad) // stride
            for m in range(stride):
                pj = (m + pad) % stride
                if pj not in used_pj:
                    continue
                b0 = (m + pad) // stride
                ph = pi * stride + pj
                pbuf_ref[ph, pl.ds(a * wq + b0, Wd), :] = \
                    x_ref[0, r, :, m * cinp:(m + 1) * cinp]

        # kh*kw shifted MXU matmuls accumulated into the VMEM f32 scratch
        first = True
        for dy in range(kh):
            for dx in range(kw):
                ph = (dy % stride) * stride + (dx % stride)
                start = (dy // stride) * wq + (dx // stride)
                lhs = pbuf_ref[ph, pl.ds(start, rows), :]
                contrib = jnp.dot(lhs, w_ref[dy * kw + dx],
                                  preferred_element_type=jnp.float32)
                if first:
                    acc_ref[...] = contrib
                    first = False
                else:
                    acc_ref[...] += contrib

        # epilogue: exact-width bf16 store + fused BN statistics
        @pl.when(pl.program_id(0) == 0)
        def _init_stats():
            stats_ref[...] = jnp.zeros_like(stats_ref)

        s = jnp.zeros((1, coutp), jnp.float32)
        ss = jnp.zeros((1, coutp), jnp.float32)
        for i in range(Ho):
            rowv = acc_ref[pl.ds(i * wq, Wo), :]
            o_ref[0, i] = rowv.astype(o_ref.dtype)
            s = s + jnp.sum(rowv, axis=0, keepdims=True)
            ss = ss + jnp.sum(rowv * rowv, axis=0, keepdims=True)
        stats_ref[0:1, :] += s
        stats_ref[1:2, :] += ss

    return kernel


def conv_kxk(x, w2, kh, kw, stride, pad):
    """KxK conv (no bias), any stride, zero padding.  x: (N,H,W,Cp) bf16,
    w2: (kh*kw, Cp, Coutp) bf16.  Returns ((N,Ho,Wo,Coutp) bf16, (8,Coutp) f32)."""
    n, h, w, cinp = x.shape
    coutp = w2.shape[2]
    ho = (h + 2 * pad - kh) // stride + 1
    wo = (w + 2 * pad - kw) // stride + 1
    assert w % stride == 0 and h % stride == 0
    wd = w // stride
    x_r = x.reshape(n, h, wd, stride * cinp)          # free reshape (metadata only)
    hq = ho + (kh - 1) // stride
    wq = wo + (kw - 1) // stride
    lp = _round_up(hq * wq + wq, 8)                   # +1 row slack for shift slices

    out, stats = pl.pallas_call(
        _make_conv_kxk_kernel(h, wd, kh, kw, stride, pad, cinp, coutp, ho, wo, wq),
        out_shape=(jax.ShapeDtypeStruct((n, ho, wo, coutp), jnp.bfloat16),
                   jax.ShapeDtypeStruct((8, coutp), jnp.float32)),
        grid=(n,),
        in_specs=[pl.BlockSpec((1, h, wd, stride * cinp), lambda i: (i, 0, 0, 0)),
                  pl.BlockSpec((kh * kw, cinp, coutp), lambda i: (0, 0, 0))],
        out_specs=(pl.BlockSpec((1, ho, wo, coutp), lambda i: (i, 0, 0, 0)),
                   pl.BlockSpec((8, coutp), lambda i: (0, 0))),
        scratch_shapes=[pltpu.VMEM((stride * stride, lp, cinp), jnp.bfloat16),
                        pltpu.VMEM((ho * wq, coutp), jnp.float32)],
        compiler_params=_cparams("arbitrary"),   # stats block is revisited across N
    )(x_r, w2)
    return out, stats


def conv_1x1(x, wm):
    """1x1 stride-1 conv == channel matmul with fused BN stats."""
    n, h, w, c = x.shape
    out, stats = pallas_matmul(x.reshape(n * h * w, c), wm, with_stats=True)
    return out.reshape(n, h, w, wm.shape[1]), stats


# ---- 3x3 stride-2 maxpool (in-kernel padding / phase split) -------------------


def _make_maxpool_kernel(H, Wd, Ho, Wo, wq, cp):
    rows = Ho * wq

    def kernel(x_ref, o_ref, pbuf_ref):
        # input is post-ReLU (>= 0), so zero fill is the identity for max-with-pad
        pbuf_ref[...] = jnp.zeros_like(pbuf_ref)
        for r in range(H):
            pi = (r + 1) % 2
            a = (r + 1) // 2
            for m in range(2):
                pj = (m + 1) % 2
                b0 = (m + 1) // 2
                ph = pi * 2 + pj
                pbuf_ref[ph, pl.ds(a * wq + b0, Wd), :] = \
                    x_ref[0, r, :, m * cp:(m + 1) * cp]
        acc = None
        for dy in range(3):
            for dx in range(3):
                ph = (dy % 2) * 2 + (dx % 2)
                start = (dy // 2) * wq + (dx // 2)
                v = pbuf_ref[ph, pl.ds(start, rows), :]
                acc = v if acc is None else jnp.maximum(acc, v)
        for i in range(Ho):
            o_ref[0, i] = acc[i * wq:i * wq + Wo, :]

    return kernel


def maxpool_3x3_s2_p1(x):
    n, h, w, cp = x.shape
    ho = (h + 2 - 3) // 2 + 1
    wo = (w + 2 - 3) // 2 + 1
    wd = w // 2
    hq, wq = ho + 1, wo + 1
    lp = _round_up(hq * wq + wq, 8)
    x_r = x.reshape(n, h, wd, 2 * cp)                 # free reshape
    return pl.pallas_call(
        _make_maxpool_kernel(h, wd, ho, wo, wq, cp),
        out_shape=jax.ShapeDtypeStruct((n, ho, wo, cp), x.dtype),
        grid=(n,),
        in_specs=[pl.BlockSpec((1, h, wd, 2 * cp), lambda i: (i, 0, 0, 0))],
        out_specs=pl.BlockSpec((1, ho, wo, cp), lambda i: (i, 0, 0, 0)),
        scratch_shapes=[pltpu.VMEM((4, lp, cp), x.dtype)],
        compiler_params=_cparams("parallel"),
    )(x_r)


# ---- 7x7 stem conv: XLA im2col (cin_real = 3) + single fused-stats matmul -----


def stem_conv(x_nhwc3, w_col, cout_p):
    n, h, w, _ = x_nhwc3.shape
    kh, stride, pad = 7, 2, 3
    ho = (h + 2 * pad - kh) // stride + 1
    wo = (w + 2 * pad - kh) // stride + 1
    xp = jnp.pad(x_nhwc3, ((0, 0), (pad, pad), (pad, pad), (0, 0)))
    cols = []
    for dy in range(kh):
        for dx in range(kh):
            cols.append(xp[:, dy:dy + stride * (ho - 1) + 1:stride,
                           dx:dx + stride * (wo - 1) + 1:stride, :])
    patches = jnp.concatenate(cols, axis=-1)                    # (N, ho, wo, 147)
    kdim = patches.shape[-1]
    kpad = _round_up(kdim, LANE)                                # 147 -> 256
    patches = jnp.pad(patches, ((0, 0), (0, 0), (0, 0), (0, kpad - kdim)))
    out, stats = pallas_matmul(
        patches.reshape(n * ho * wo, kpad).astype(jnp.bfloat16),
        w_col, with_stats=True)
    return out.reshape(n, ho, wo, cout_p), stats


# --------------------------- conditional BatchNorm ----------------------------


def _bn_scale_shift(bn_p, cond, stats, m_real):
    mean = stats[0] / m_real
    var = stats[1] / m_real - mean * mean
    inv = jax.lax.rsqrt(var + BN_EPS)
    scale = bn_p["gamma"][cond] * inv
    shift = bn_p["beta"][cond] - mean * scale
    cp = scale.shape[0]
    return (scale.reshape(1, cp).astype(jnp.float32),
            shift.reshape(1, cp).astype(jnp.float32))


def _make_bn_apply_kernel(relu, res_mode):
    def kernel(*refs):
        if res_mode == "affine":
            x_ref, sc_ref, sh_ref, r_ref, rsc_ref, rsh_ref, o_ref = refs
        elif res_mode == "plain":
            x_ref, sc_ref, sh_ref, r_ref, o_ref = refs
        else:
            x_ref, sc_ref, sh_ref, o_ref = refs
        y = x_ref[...].astype(jnp.float32) * sc_ref[...] + sh_ref[...]
        if res_mode == "affine":
            y = y + (r_ref[...].astype(jnp.float32) * rsc_ref[...] + rsh_ref[...])
        elif res_mode == "plain":
            y = y + r_ref[...].astype(jnp.float32)
        if relu:
            y = jnp.maximum(y, 0.0)
        o_ref[...] = y.astype(o_ref.dtype)
    return kernel


def cond_bn(x, stats, bn_p, cond, relu=True, residual=None,
            residual_pre=None, residual_stats=None, residual_bn_p=None):
    """Conditional BatchNorm2d (batch statistics) using the stats that were fused
    into the producing conv.  `residual` is a post-activation bf16 identity
    shortcut; `residual_pre` (+ its stats / BN params) is the raw downsample-conv
    output, normalized and added inside the same apply kernel.  Returns bf16."""
    n, h, w, cp = x.shape
    m = n * h * w
    tm = min(512, _round_up(m, 8))
    mp = _round_up(m, tm)

    def rows(a):
        a2 = a.reshape(m, cp)
        return a2 if mp == m else jnp.pad(a2, ((0, mp - m), (0, 0)))

    scale, shift = _bn_scale_shift(bn_p, cond, stats, m)
    row_spec = pl.BlockSpec((tm, cp), lambda i: (i, 0))
    vec_spec = pl.BlockSpec((1, cp), lambda i: (0, 0))
    args = [rows(x), scale, shift]
    in_specs = [row_spec, vec_spec, vec_spec]
    if residual_pre is not None:
        rscale, rshift = _bn_scale_shift(residual_bn_p, cond, residual_stats, m)
        args += [rows(residual_pre), rscale, rshift]
        in_specs += [row_spec, vec_spec, vec_spec]
        res_mode = "affine"
    elif residual is not None:
        args.append(rows(residual))
        in_specs.append(row_spec)
        res_mode = "plain"
    else:
        res_mode = None

    out = pl.pallas_call(
        _make_bn_apply_kernel(relu, res_mode),
        out_shape=jax.ShapeDtypeStruct((mp, cp), jnp.bfloat16),
        grid=(mp // tm,),
        in_specs=in_specs,
        out_specs=row_spec,
        compiler_params=_cparams("parallel"),
    )(*args)
    return out[:m].reshape(n, h, w, cp)


# --------------------------- global pool / classifier --------------------------


def _gap_kernel(x_ref, o_ref):
    o_ref[...] = jnp.mean(x_ref[...].astype(jnp.float32), axis=1)


def global_avg_pool(x):
    n, h, w, cp = x.shape
    xf = x.reshape(n, h * w, cp)
    tc = 128 if cp % 128 == 0 else cp
    return pl.pallas_call(
        _gap_kernel,
        out_shape=jax.ShapeDtypeStruct((n, cp), jnp.float32),
        grid=(cp // tc,),
        in_specs=[pl.BlockSpec((n, h * w, tc), lambda j: (0, 0, j))],
        out_specs=pl.BlockSpec((n, tc), lambda j: (0, j)),
        compiler_params=_cparams("parallel"),
    )(xf)


def linear(feat, fc):
    logits = pallas_matmul(feat, fc["w"], out_dtype=jnp.float32) + fc["b"][None, :]
    return logits[:, :fc["nout"]]


# ============================ parameter construction ==========================


def _conv_init(key, cin, cout, kh, kw):
    fan_in = cin * kh * kw
    return jax.random.normal(key, (cout, cin, kh, kw), jnp.float32) * \
        jnp.sqrt(2.0 / fan_in)


def _prep_conv(w_oihw, stride, pad):
    """Pad channels to lane multiples, reorder for the kernels, cast to bf16."""
    kh, kw = w_oihw.shape[2], w_oihw.shape[3]
    wp = _pad_axis(_pad_axis(w_oihw, 0), 1)
    coutp, cinp = wp.shape[0], wp.shape[1]
    if kh == 1 and kw == 1 and stride == 1:
        wm = jnp.transpose(wp[:, :, 0, 0], (1, 0)).astype(jnp.bfloat16)
        return {"kind": "1x1", "wm": wm}
    w2 = jnp.transpose(wp, (2, 3, 1, 0)).reshape(kh * kw, cinp, coutp)
    return {"kind": "kxk", "w2": w2.astype(jnp.bfloat16), "kh": kh, "kw": kw,
            "stride": stride, "pad": pad}


def _prep_stem(w_oihw):
    """7x7 stem weights as an im2col matrix: (49*3 -> padded 256, Coutp)."""
    cout = w_oihw.shape[0]
    coutp = _round_up(cout, LANE)
    kdim = w_oihw.shape[1] * w_oihw.shape[2] * w_oihw.shape[3]
    w = jnp.transpose(w_oihw, (2, 3, 1, 0)).reshape(kdim, cout)
    kpad = _round_up(kdim, LANE)
    w = jnp.pad(w, ((0, kpad - kdim), (0, coutp - cout)))
    return {"kind": "stem", "w_col": w.astype(jnp.bfloat16), "coutp": coutp}


def _bn_init(key, c):
    kg, kb = jax.random.split(key)
    # distinct gamma/beta per condition so `cond` actually changes the output;
    # padded channels get gamma=beta=0 so they stay exactly zero end-to-end.
    gamma = 1.0 + 0.1 * jax.random.normal(kg, (NUM_CONDS, c), jnp.float32)
    beta = 0.1 * jax.random.normal(kb, (NUM_CONDS, c), jnp.float32)
    return {"gamma": _pad_axis(gamma, 1), "beta": _pad_axis(beta, 1)}


def _make_bottleneck(key, cin, width, stride):
    cout = width * EXPANSION
    ks = jax.random.split(key, 8)
    p = {
        "conv1": _prep_conv(_conv_init(ks[0], cin, width, 1, 1), 1, 0),
        "bn1": _bn_init(ks[1], width),
        "conv2": _prep_conv(_conv_init(ks[2], width, width, 3, 3), stride, 1),
        "bn2": _bn_init(ks[3], width),
        "conv3": _prep_conv(_conv_init(ks[4], width, cout, 1, 1), 1, 0),
        "bn3": _bn_init(ks[5], cout),
    }
    if stride != 1 or cin != cout:
        p["down_conv"] = _prep_conv(_conv_init(ks[6], cin, cout, 1, 1), stride, 0)
        p["down_bn"] = _bn_init(ks[7], cout)
    return p, cout


def init_model(key):
    total_blocks = sum(BLOCKS)
    keys = jax.random.split(key, 4 + total_blocks)
    params = {
        "conv1": _prep_stem(_conv_init(keys[0], 3, STEM_CH, 7, 7)),
        "bn1": _bn_init(keys[1], STEM_CH),
    }
    cin = STEM_CH
    layers = []
    kidx = 2
    for li, (width, nblocks) in enumerate(zip(LAYER_WIDTHS, BLOCKS)):
        layer_stride = 1 if li == 0 else 2
        blocks = []
        for bi in range(nblocks):
            blk, cin = _make_bottleneck(keys[kidx], cin, width,
                                        layer_stride if bi == 0 else 1)
            kidx += 1
            blocks.append(blk)
        layers.append(blocks)
    params["layers"] = layers
    params["layer_chs"] = tuple(wd * EXPANSION for wd in LAYER_WIDTHS)
    fcw = jax.random.normal(keys[kidx], (NUM_CLASSES, cin), jnp.float32) * \
        jnp.sqrt(1.0 / cin)
    fcb = 0.01 * jax.random.normal(keys[kidx + 1], (NUM_CLASSES,), jnp.float32)
    outp = _round_up(NUM_CLASSES, LANE)
    cinp = _round_up(cin, LANE)
    params["fc"] = {
        "w": jnp.pad(fcw.T, ((0, cinp - cin), (0, outp - NUM_CLASSES))
                     ).astype(jnp.bfloat16),
        "b": jnp.pad(fcb, (0, outp - NUM_CLASSES)),
        "nout": NUM_CLASSES,
    }
    return params


# ================================ forward pass ================================


def apply_conv(p, x):
    if p["kind"] == "1x1":
        return conv_1x1(x, p["wm"])
    return conv_kxk(x, p["w2"], p["kh"], p["kw"], p["stride"], p["pad"])


def bottleneck_forward(p, x, cond):
    out, s1 = apply_conv(p["conv1"], x)
    out = cond_bn(out, s1, p["bn1"], cond, relu=True)
    out, s2 = apply_conv(p["conv2"], out)
    out = cond_bn(out, s2, p["bn2"], cond, relu=True)
    out, s3 = apply_conv(p["conv3"], out)
    if "down_conv" in p:
        ds, sd = apply_conv(p["down_conv"], x)
        # bn3 + downsample-bn + residual add + ReLU fused in one Pallas pass
        return cond_bn(out, s3, p["bn3"], cond, relu=True,
                       residual_pre=ds, residual_stats=sd,
                       residual_bn_p=p["down_bn"])
    # bn3 + identity residual + ReLU fused
    return cond_bn(out, s3, p["bn3"], cond, relu=True, residual=x)


def _to_nchw(x, c_real):
    return jnp.transpose(x[..., :c_real].astype(jnp.float32), (0, 3, 1, 2))


def custom_resnet_forward(params, x_nchw, cond=None, return_map=False,
                          corr_layer=None):
    """Mirrors CustomResNet.forward / _forward_impl semantics."""
    if cond is None:
        raise ValueError("Missing parameter 'cond'. Please specify a condition index.")
    want_maps = return_map or (corr_layer is not None)
    y = {}

    x = jnp.transpose(x_nchw.astype(jnp.float32), (0, 2, 3, 1)).astype(jnp.bfloat16)
    x, s0 = stem_conv(x, params["conv1"]["w_col"], params["conv1"]["coutp"])
    x = cond_bn(x, s0, params["bn1"], cond, relu=True)            # bn1 + act1
    x = maxpool_3x3_s2_p1(x)                                      # base.maxpool

    for b in params["layers"][0]:
        x = bottleneck_forward(b, x, cond)
    if want_maps:
        y["layer1"] = _to_nchw(x, params["layer_chs"][0])
    for b in params["layers"][1]:
        x = bottleneck_forward(b, x, cond)
    if want_maps:
        y["layer2"] = _to_nchw(x, params["layer_chs"][1])
    for b in params["layers"][2]:
        x = bottleneck_forward(b, x, cond)
    if want_maps:
        y["layer3"] = _to_nchw(x, params["layer_chs"][2])

    if corr_layer is None or 4 in corr_layer:
        for b in params["layers"][3]:
            x = bottleneck_forward(b, x, cond)
        if want_maps:
            y["layer4"] = _to_nchw(x, params["layer_chs"][3])

    if corr_layer is None:
        feat = global_avg_pool(x)                                 # global_pool + flatten
        logits = linear(feat, params["fc"])                       # fc
        return (logits, y) if return_map else logits
    return (None, y)


# ==================================== main ====================================

if __name__ == "__main__":
    root = jax.random.PRNGKey(0)
    k_param, k_data = jax.random.split(root)

    params = init_model(k_param)
    x = jax.random.normal(k_data, (2, 3, 32, 32), jnp.float32)    # NCHW like PyTorch

    logits = custom_resnet_forward(params, x, cond=0)
    logits = jax.block_until_ready(logits)
    assert logits.shape == (2, NUM_CLASSES), logits.shape
    assert bool(jnp.all(jnp.isfinite(logits)))

    # also exercise cond=1 and the feature-map path once
    out1, fmaps = custom_resnet_forward(params, x, cond=1, return_map=True)
    jax.block_until_ready(out1)
    assert fmaps["layer4"].shape[1] == LAYER_WIDTHS[-1] * EXPANSION

    print("KERNEL_OK")
</pallas_src>

<mosaic_0001>
module attributes {stable_mosaic.version = 11 : i64} {
  func.func @_matmul_stats_kernel(%arg0: i32, %arg1: i32, %arg2: i32, %arg3: memref<512x256xbf16, #tpu.memory_space<vmem>>, %arg4: memref<256x128xbf16, #tpu.memory_space<vmem>>, %arg5: memref<512x128xbf16, #tpu.memory_space<vmem>>, %arg6: memref<8x128xf32, #tpu.memory_space<vmem>>, %arg7: memref<512x128xf32, #tpu.memory_space<vmem>>) attributes {dimension_semantics = [#tpu.dimension_semantics<parallel>, #tpu.dimension_semantics<arbitrary>, #tpu.dimension_semantics<arbitrary>], iteration_bounds = array<i64: 1, 1, 1>, scalar_prefetch = 0 : i64, scratch_operands = 1 : i64, tpu.core_type = #tpu.core_type<tc>, window_params = [{transform_indices = @transform_0, window_bounds = array<i64: 512, 256>}, {transform_indices = @transform_1, window_bounds = array<i64: 256, 128>}, {transform_indices = @transform_2, window_bounds = array<i64: 512, 128>}, {transform_indices = @transform_3, window_bounds = array<i64: 8, 128>}]} {
    %c0_i32 = arith.constant 0 : i32
    %0 = arith.cmpi eq, %arg2, %c0_i32 : i32
    %1 = arith.extui %0 : i1 to i32
    %c0_i32_0 = arith.constant 0 : i32
    %2 = arith.cmpi ne, %1, %c0_i32_0 : i32
    scf.if %2 {
      %cst_13 = arith.constant 0.000000e+00 : f32
      %17 = vector.broadcast %cst_13 : f32 to vector<512x128xf32>
      %c0_14 = arith.constant 0 : index
      %c0_15 = arith.constant 0 : index
      %18 = vector.load %arg7[%c0_14, %c0_15] : memref<512x128xf32, #tpu.memory_space<vmem>>, vector<512x128xf32>
      tpu.vector_store %arg7[%c0_14, %c0_15], %17 {strides = array<i32>} : memref<512x128xf32, #tpu.memory_space<vmem>>, vector<512x128xf32>,
    } else {
    }
    %c0 = arith.constant 0 : index
    %c0_1 = arith.constant 0 : index
    %3 = vector.load %arg7[%c0, %c0_1] : memref<512x128xf32, #tpu.memory_space<vmem>>, vector<512x128xf32>
    %c0_2 = arith.constant 0 : index
    %c0_3 = arith.constant 0 : index
    %4 = vector.load %arg3[%c0_2, %c0_3] : memref<512x256xbf16, #tpu.memory_space<vmem>>, vector<512x256xbf16>
    %c0_4 = arith.constant 0 : index
    %c0_5 = arith.constant 0 : index
    %5 = vector.load %arg4[%c0_4, %c0_5] : memref<256x128xbf16, #tpu.memory_space<vmem>>, vector<256x128xbf16>
    %cst = arith.constant dense<0.000000e+00> : vector<512x128xf32>
    %6 = tpu.matmul %4, %5, %cst {dimension_numbers = #tpu.dot_dimension_numbers<[1], [0], [0], [1], [0, 0, 1, 1], [], []>} : vector<512x256xbf16>, vector<256x128xbf16>, vector<512x128xf32> -> vector<512x128xf32>
    %7 = arith.addf %3, %6 : vector<512x128xf32>
    %c0_6 = arith.constant 0 : index
    %c0_7 = arith.constant 0 : index
    %8 = vector.load %arg7[%c0_6, %c0_7] : memref<512x128xf32, #tpu.memory_space<vmem>>, vector<512x128xf32>
    tpu.vector_store %arg7[%c0_6, %c0_7], %7 {strides = array<i32>} : memref<512x128xf32, #tpu.memory_space<vmem>>, vector<512x128xf32>,
    %c0_i32_8 = arith.constant 0 : i32
    %9 = arith.cmpi eq, %arg2, %c0_i32_8 : i32
    %c0_i32_9 = arith.constant 0 : i32
    %10 = arith.cmpi eq, %arg1, %c0_i32_9 : i32
    %11 = arith.andi %9, %10 : i1
    %12 = arith.extui %11 : i1 to i32
    %c0_i32_10 = arith.constant 0 : i32
    %13 = arith.cmpi ne, %12, %c0_i32_10 : i32
    scf.if %13 {
      %cst_13 = arith.constant 0.000000e+00 : f32
      %17 = vector.broadcast %cst_13 : f32 to vector<8x128xf32>
      %c0_14 = arith.constant 0 : index
      %c0_15 = arith.constant 0 : index
      %18 = vector.load %arg6[%c0_14, %c0_15] : memref<8x128xf32, #tpu.memory_space<vmem>>, vector<8x128xf32>
      tpu.vector_store %arg6[%c0_14, %c0_15], %17 {strides = array<i32>} : memref<8x128xf32, #tpu.memory_space<vmem>>, vector<8x128xf32>,
    } else {
    }
    %c0_i32_11 = arith.constant 0 : i32
    %14 = arith.cmpi eq, %arg2, %c0_i32_11 : i32
    %15 = arith.extui %14 : i1 to i32
    %c0_i32_12 = arith.constant 0 : i32
    %16 = arith.cmpi ne, %15, %c0_i32_12 : i32
    scf.if %16 {
      %c0_13 = arith.constant 0 : index
      %c0_14 = arith.constant 0 : index
      %17 = vector.load %arg7[%c0_13, %c0_14] : memref<512x128xf32, #tpu.memory_space<vmem>>, vector<512x128xf32>
      %18 = arith.truncf %17 : vector<512x128xf32> to vector<512x128xbf16>
      %c0_15 = arith.constant 0 : index
      %c0_16 = arith.constant 0 : index
      %19 = vector.load %arg5[%c0_15, %c0_16] : memref<512x128xbf16, #tpu.memory_space<vmem>>, vector<512x128xbf16>
      tpu.vector_store %arg5[%c0_15, %c0_16], %18 {strides = array<i32>} : memref<512x128xbf16, #tpu.memory_space<vmem>>, vector<512x128xbf16>,
      %c0_17 = arith.constant 0 : index
      %c0_18 = arith.constant 0 : index
      %20 = vector.load %arg6[%c0_17, %c0_18] : memref<8x128xf32, #tpu.memory_space<vmem>>, vector<1x128xf32>
      %cst_19 = arith.constant dense<0.000000e+00> : vector<128xf32>
      %21 = vector.multi_reduction <add>, %17, %cst_19 [0] : vector<512x128xf32> to vector<128xf32>
      %22 = vector.shape_cast %21 : vector<128xf32> to vector<1x128xf32>
      %23 = arith.addf %20, %22 : vector<1x128xf32>
      %c0_20 = arith.constant 0 : index
      %c0_21 = arith.constant 0 : index
      %24 = vector.load %arg6[%c0_20, %c0_21] : memref<8x128xf32, #tpu.memory_space<vmem>>, vector<1x128xf32>
      tpu.vector_store %arg6[%c0_20, %c0_21], %23 {strides = array<i32>} : memref<8x128xf32, #tpu.memory_space<vmem>>, vector<1x128xf32>,
      %c1 = arith.constant 1 : index
      %c0_22 = arith.constant 0 : index
      %25 = vector.load %arg6[%c1, %c0_22] : memref<8x128xf32, #tpu.memory_space<vmem>>, vector<1x128xf32>
      %26 = arith.mulf %17, %17 : vector<512x128xf32>
      %cst_23 = arith.constant dense<0.000000e+00> : vector<128xf32>
      %27 = vector.multi_reduction <add>, %26, %cst_23 [0] : vector<512x128xf32> to vector<128xf32>
      %28 = vector.shape_cast %27 : vector<128xf32> to vector<1x128xf32>
      %29 = arith.addf %25, %28 : vector<1x128xf32>
      %c1_24 = arith.constant 1 : index
      %c0_25 = arith.constant 0 : index
      %30 = vector.load %arg6[%c1_24, %c0_25] : memref<8x128xf32, #tpu.memory_space<vmem>>, vector<1x128xf32>
      tpu.vector_store %arg6[%c1_24, %c0_25], %29 {strides = array<i32>} : memref<8x128xf32, #tpu.memory_space<vmem>>, vector<1x128xf32>,
    } else {
    }
    return
  }
  func.func @transform_0(%arg0: i32, %arg1: i32, %arg2: i32) -> (i32, i32) {
    %c0_i32 = arith.constant 0 : i32
    return %arg1, %arg2 : i32, i32
  }
  func.func @transform_1(%arg0: i32, %arg1: i32, %arg2: i32) -> (i32, i32) {
    %c0_i32 = arith.constant 0 : i32
    return %arg2, %arg0 : i32, i32
  }
  func.func @transform_2(%arg0: i32, %arg1: i32, %arg2: i32) -> (i32, i32) {
    %c0_i32 = arith.constant 0 : i32
    return %arg1, %arg0 : i32, i32
  }
  func.func @transform_3(%arg0: i32, %arg1: i32, %arg2: i32) -> (i32, i32) {
    %c0_i32 = arith.constant 0 : i32
    %c0_i32_0 = arith.constant 0 : i32
    return %c0_i32, %arg0 : i32, i32
  }
}

</mosaic_0001>

<llo_original>
// kernel: tpu_custom_call.1
$region0: #{tpu_custom_call.1}
  #allocation0 [shape = 'u32[]', space=smem, size = 0x4, offset = 0x4, fixed_abs, tag = 'smem constant byte address 0x4 - core index']
  #allocation1 [shape = 'u32[72,128]{1,0:T(1,128)}', space=vmem, size = 0x9000, scoped, tag = 'internal scratch']
  #allocation2 [shape = 'f32[512,128]{1,0:T(8,128)}', space=vmem, size = 0x40000, scoped, tag = 'scratch operand']
  %s0 = inlined_call_operand.hbm [shape: bf16[512,256], index: 0, kind: input, shape index: {}]
  %s1 = inlined_call_operand.hbm [shape: bf16[256,128], index: 1, kind: input, shape index: {}]
  %s2 = inlined_call_operand.hbm [shape: bf16[512,128], index: 2, kind: output, shape index: {0}]
  %s3 = inlined_call_operand.hbm [shape: f32[8,128], index: 3, kind: output, shape index: {1}]
  %4 = xla_tuple %s2, %s3
  %s5 = sld [smem:[#allocation0]]
  $region46: #{tpu_custom_call.1} parent=0
    _
  %s7 = ssub.s32 1, %s5
  %s8 = scalar_select 0, %s7, %s5
  $region1: #{tpu_custom_call.1} parent=0
    #allocation3 [shape = 'u8[262144]{0}', space=vmem, size = 0x40000, scoped, tag = 'input window, operand 0, single buffered']
    #allocation4 [shape = 's32[1]{0}', space=sflag, size = 0x4, scoped, tag = 'scoped memory for tpu_custom_call.1']
    #allocation5 [shape = 's32[1]{0}', space=sflag, size = 0x4, scoped, tag = 'scoped memory for tpu_custom_call.1']
    #allocation6 [shape = 'u8[65536]{0}', space=vmem, size = 0x10000, scoped, tag = 'input window, operand 1, single buffered']
    #allocation7 [shape = 's32[1]{0}', space=sflag, size = 0x4, scoped, tag = 'scoped memory for tpu_custom_call.1']
    #allocation8 [shape = 'u8[131072]{0}', space=vmem, size = 0x20000, scoped, tag = 'output window, operand 0, single buffered']
    #allocation9 [shape = 'u8[4096]{0}', space=vmem, size = 0x1000, scoped, tag = 'output window, operand 1, single buffered']
    #allocation10 [shape = 's32[1]{0}', space=sflag, size = 0x4, scoped, tag = 'scoped memory for tpu_custom_call.1']
    %9 = vsyncpa [#allocation4], 0
    %10 = vsyncpa [#allocation7], 0
    %11 = vsyncpa [#allocation5], 0
    %12 = vsyncpa [#allocation10], 0
    // Predicated region
    $region2: #{tpu_custom_call.1} parent=1 // pred_check
      _
    $region3: #{tpu_custom_call.1} parent=1 // pred_check_branch
      %14 = sbr.rel (0) target = $region5
    $region4: #{tpu_custom_call.1} parent=1 // pred_region
      %16 = vsyncadd [#allocation4], 0
      %s17 = sshll.u32 %s0, 4
      %s18 = int_to_ptr.hbm [resolvable:$true] %s17
      %s19 = sshll.u32 [#allocation3], 4
      %s20 = int_to_ptr.vmem [resolvable:$true] %s19
      %25 = dma.hbm_to_vmem [thread:$0]  %s18, 8192, %s20, [#allocation4], 128, 128, 8
    $region5: #{tpu_custom_call.1} parent=1 // pred_fallthru
      _
    // Predicated region
    $region6: #{tpu_custom_call.1} parent=1 // pred_check
      _
    $region7: #{tpu_custom_call.1} parent=1 // pred_check_branch
      %27 = sbr.rel (0) target = $region9
    $region8: #{tpu_custom_call.1} parent=1 // pred_region
      %29 = vsyncadd [#allocation7], 0
      %s30 = sshll.u32 %s1, 4
      %s31 = int_to_ptr.hbm [resolvable:$true] %s30
      %s32 = sshll.u32 [#allocation6], 4
      %s33 = int_to_ptr.vmem [resolvable:$true] %s32
      %38 = dma.hbm_to_vmem [thread:$0]  %s31, 2048, %s33, [#allocation7], 64, 64, 4
    $region9: #{tpu_custom_call.1} parent=1 // pred_fallthru
      _
    // Predicated region
    $region10: #{tpu_custom_call.1} parent=1 // pred_check
      _
    $region11: #{tpu_custom_call.1} parent=1 // pred_check_branch
      %40 = sbr.rel (0) target = $region13
    $region12: #{tpu_custom_call.1} parent=1 // pred_region
      %42 = dma.done [#allocation4], 8192
    $region13: #{tpu_custom_call.1} parent=1 // pred_fallthru
      _
    // Predicated region
    $region14: #{tpu_custom_call.1} parent=1 // pred_check
      _
    $region15: #{tpu_custom_call.1} parent=1 // pred_check_branch
      %44 = sbr.rel (0) target = $region17
    $region16: #{tpu_custom_call.1} parent=1 // pred_region
      %46 = dma.done [#allocation7], 2048
    $region17: #{tpu_custom_call.1} parent=1 // pred_fallthru
      _
    %p47 = scmp.eq.s32.totalorder 0, 0
    // Predicated region
    $region18: #{tpu_custom_call.1} parent=1 // pred_check
      %p48 = pneg %p47
    $region19: #{tpu_custom_call.1} parent=1 // pred_check_branch
      %50 = sbr.rel (%p48) target = $region21
    $region20: #{tpu_custom_call.1} parent=1 // pred_region
      %51 = vst [vmem:[#allocation2] sm:$0xff] 0.0
      %52 = vst [vmem:[#allocation2 + $0x8] sm:$0xff] 0.0
      %53 = vst [vmem:[#allocation2 + $0x10] sm:$0xff] 0.0
      %54 = vst [vmem:[#allocation2 + $0x18] sm:$0xff] 0.0
      %55 = vst [vmem:[#allocation2 + $0x20] sm:$0xff] 0.0
      %56 = vst [vmem:[#allocation2 + $0x28] sm:$0xff] 0.0
      %57 = vst [vmem:[#allocation2 + $0x30] sm:$0xff] 0.0
      %58 = vst [vmem:[#allocation2 + $0x38] sm:$0xff] 0.0
      %59 = vst [vmem:[#allocation2 + $0x40] sm:$0xff] 0.0
      %60 = vst [vmem:[#allocation2 + $0x48] sm:$0xff] 0.0
      %61 = vst [vmem:[#allocation2 + $0x50] sm:$0xff] 0.0
      %62 = vst [vmem:[#allocation2 + $0x58] sm:$0xff] 0.0
      %63 = vst [vmem:[#allocation2 + $0x60] sm:$0xff] 0.0
      %64 = vst [vmem:[#allocation2 + $0x68] sm:$0xff] 0.0
      %65 = vst [vmem:[#allocation2 + $0x70] sm:$0xff] 0.0
      %66 = vst [vmem:[#allocation2 + $0x78] sm:$0xff] 0.0
      %67 = vst [vmem:[#allocation2 + $0x80] sm:$0xff] 0.0
      %68 = vst [vmem:[#allocation2 + $0x88] sm:$0xff] 0.0
      %69 = vst [vmem:[#allocation2 + $0x90] sm:$0xff] 0.0
      %70 = vst [vmem:[#allocation2 + $0x98] sm:$0xff] 0.0
      %71 = vst [vmem:[#allocation2 + $0xa0] sm:$0xff] 0.0
      %72 = vst [vmem:[#allocation2 + $0xa8] sm:$0xff] 0.0
      %73 = vst [vmem:[#allocation2 + $0xb0] sm:$0xff] 0.0
      %74 = vst [vmem:[#allocation2 + $0xb8] sm:$0xff] 0.0
      %75 = vst [vmem:[#allocation2 + $0xc0] sm:$0xff] 0.0
      %76 = vst [vmem:[#allocation2 + $0xc8] sm:$0xff] 0.0
      %77 = vst [vmem:[#allocation2 + $0xd0] sm:$0xff] 0.0
      %78 = vst [vmem:[#allocation2 + $0xd8] sm:$0xff] 0.0
      %79 = vst [vmem:[#allocation2 + $0xe0] sm:$0xff] 0.0
      %80 = vst [vmem:[#allocation2 + $0xe8] sm:$0xff] 0.0
      %81 = vst [vmem:[#allocation2 + $0xf0] sm:$0xff] 0.0
      %82 = vst [vmem:[#allocation2 + $0xf8] sm:$0xff] 0.0
      %83 = vst [vmem:[#allocation2 + $0x100] sm:$0xff] 0.0
      %84 = vst [vmem:[#allocation2 + $0x108] sm:$0xff] 0.0
      %85 = vst [vmem:[#allocation2 + $0x110] sm:$0xff] 0.0
      %86 = vst [vmem:[#allocation2 + $0x118] sm:$0xff] 0.0
      %87 = vst [vmem:[#allocation2 + $0x120] sm:$0xff] 0.0
      %88 = vst [vmem:[#allocation2 + $0x128] sm:$0xff] 0.0
      %89 = vst [vmem:[#allocation2 + $0x130] sm:$0xff] 0.0
      %90 = vst [vmem:[#allocation2 + $0x138] sm:$0xff] 0.0
      %91 = vst [vmem:[#allocation2 + $0x140] sm:$0xff] 0.0
      %92 = vst [vmem:[#allocation2 + $0x148] sm:$0xff] 0.0
      %93 = vst [vmem:[#allocation2 + $0x150] sm:$0xff] 0.0
      %94 = vst [vmem:[#allocation2 + $0x158] sm:$0xff] 0.0
      %95 = vst [vmem:[#allocation2 + $0x160] sm:$0xff] 0.0
      %96 = vst [vmem:[#allocation2 + $0x168] sm:$0xff] 0.0
      %97 = vst [vmem:[#allocation2 + $0x170] sm:$0xff] 0.0
      %98 = vst [vmem:[#allocation2 + $0x178] sm:$0xff] 0.0
      %99 = vst [vmem:[#allocation2 + $0x180] sm:$0xff] 0.0
      %100 = vst [vmem:[#allocation2 + $0x188] sm:$0xff] 0.0
      %101 = vst [vmem:[#allocation2 + $0x190] sm:$0xff] 0.0
      %102 = vst [vmem:[#allocation2 + $0x198] sm:$0xff] 0.0
      %103 = vst [vmem:[#allocation2 + $0x1a0] sm:$0xff] 0.0
      %104 = vst [vmem:[#allocation2 + $0x1a8] sm:$0xff] 0.0
      %105 = vst [vmem:[#allocation2 + $0x1b0] sm:$0xff] 0.0
      %106 = vst [vmem:[#allocation2 + $0x1b8] sm:$0xff] 0.0
      %107 = vst [vmem:[#allocation2 + $0x1c0] sm:$0xff] 0.0
      %108 = vst [vmem:[#allocation2 + $0x1c8] sm:$0xff] 0.0
      %109 = vst [vmem:[#allocation2 + $0x1d0] sm:$0xff] 0.0
      %110 = vst [vmem:[#allocation2 + $0x1d8] sm:$0xff] 0.0
      %111 = vst [vmem:[#allocation2 + $0x1e0] sm:$0xff] 0.0
      %112 = vst [vmem:[#allocation2 + $0x1e8] sm:$0xff] 0.0
      %113 = vst [vmem:[#allocation2 + $0x1f0] sm:$0xff] 0.0
      %114 = vst [vmem:[#allocation2 + $0x1f8] sm:$0xff] 0.0
    $region21: #{tpu_custom_call.1} parent=1 // pred_fallthru
      _
    %v115 = vld [vmem:[#allocation2] sm:$0xff]
    %v116 = vld [vmem:[#allocation2 + $0x8] sm:$0xff]
    %v117 = vld [vmem:[#allocation2 + $0x10] sm:$0xff]
    %v118 = vld [vmem:[#allocation2 + $0x18] sm:$0xff]
    %v119 = vld [vmem:[#allocation2 + $0x20] sm:$0xff]
    %v120 = vld [vmem:[#allocation2 + $0x28] sm:$0xff]
    %v121 = vld [vmem:[#allocation2 + $0x30] sm:$0xff]
    %v122 = vld [vmem:[#allocation2 + $0x38] sm:$0xff]
    %v123 = vld [vmem:[#allocation2 + $0x40] sm:$0xff]
    %v124 = vld [vmem:[#allocation2 + $0x48] sm:$0xff]
    %v125 = vld [vmem:[#allocation2 + $0x50] sm:$0xff]
    %v126 = vld [vmem:[#allocation2 + $0x58] sm:$0xff]
    %v127 = vld [vmem:[#allocation2 + $0x60] sm:$0xff]
    %v128 = vld [vmem:[#allocation2 + $0x68] sm:$0xff]
    %v129 = vld [vmem:[#allocation2 + $0x70] sm:$0xff]
    %v130 = vld [vmem:[#allocation2 + $0x78] sm:$0xff]
    %v131 = vld [vmem:[#allocation2 + $0x80] sm:$0xff]
    %v132 = vld [vmem:[#allocation2 + $0x88] sm:$0xff]
    %v133 = vld [vmem:[#allocation2 + $0x90] sm:$0xff]
    %v134 = vld [vmem:[#allocation2 + $0x98] sm:$0xff]
    %v135 = vld [vmem:[#allocation2 + $0xa0] sm:$0xff]
    %v136 = vld [vmem:[#allocation2 + $0xa8] sm:$0xff]
    %v137 = vld [vmem:[#allocation2 + $0xb0] sm:$0xff]
    %v138 = vld [vmem:[#allocation2 + $0xb8] sm:$0xff]
    %v139 = vld [vmem:[#allocation2 + $0xc0] sm:$0xff]
    %v140 = vld [vmem:[#allocation2 + $0xc8] sm:$0xff]
    %v141 = vld [vmem:[#allocation2 + $0xd0] sm:$0xff]
    %v142 = vld [vmem:[#allocation2 + $0xd8] sm:$0xff]
    %v143 = vld [vmem:[#allocation2 + $0xe0] sm:$0xff]
    %v144 = vld [vmem:[#allocation2 + $0xe8] sm:$0xff]
    %v145 = vld [vmem:[#allocation2 + $0xf0] sm:$0xff]
    %v146 = vld [vmem:[#allocation2 + $0xf8] sm:$0xff]
    %v147 = vld [vmem:[#allocation2 + $0x100] sm:$0xff]
    %v148 = vld [vmem:[#allocation2 + $0x108] sm:$0xff]
    %v149 = vld [vmem:[#allocation2 + $0x110] sm:$0xff]
    %v150 = vld [vmem:[#allocation2 + $0x118] sm:$0xff]
    %v151 = vld [vmem:[#allocation2 + $0x120] sm:$0xff]
    %v152 = vld [vmem:[#allocation2 + $0x128] sm:$0xff]
    %v153 = vld [vmem:[#allocation2 + $0x130] sm:$0xff]
    %v154 = vld [vmem:[#allocation2 + $0x138] sm:$0xff]
    %v155 = vld [vmem:[#allocation2 + $0x140] sm:$0xff]
    %v156 = vld [vmem:[#allocation2 + $0x148] sm:$0xff]
    %v157 = vld [vmem:[#allocation2 + $0x150] sm:$0xff]
    %v158 = vld [vmem:[#allocation2 + $0x158] sm:$0xff]
    %v159 = vld [vmem:[#allocation2 + $0x160] sm:$0xff]
    %v160 = vld [vmem:[#allocation2 + $0x168] sm:$0xff]
    %v161 = vld [vmem:[#allocation2 + $0x170] sm:$0xff]
    %v162 = vld [vmem:[#allocation2 + $0x178] sm:$0xff]
    %v163 = vld [vmem:[#allocation2 + $0x180] sm:$0xff]
    %v164 = vld [vmem:[#allocation2 + $0x188] sm:$0xff]
    %v165 = vld [vmem:[#allocation2 + $0x190] sm:$0xff]
    %v166 = vld [vmem:[#allocation2 + $0x198] sm:$0xff]
    %v167 = vld [vmem:[#allocation2 + $0x1a0] sm:$0xff]
    %v168 = vld [vmem:[#allocation2 + $0x1a8] sm:$0xff]
    %v169 = vld [vmem:[#allocation2 + $0x1b0] sm:$0xff]
    %v170 = vld [vmem:[#allocation2 + $0x1b8] sm:$0xff]
    %v171 = vld [vmem:[#allocation2 + $0x1c0] sm:$0xff]
    %v172 = vld [vmem:[#allocation2 + $0x1c8] sm:$0xff]
    %v173 = vld [vmem:[#allocation2 + $0x1d0] sm:$0xff]
    %v174 = vld [vmem:[#allocation2 + $0x1d8] sm:$0xff]
    %v175 = vld [vmem:[#allocation2 + $0x1e0] sm:$0xff]
    %v176 = vld [vmem:[#allocation2 + $0x1e8] sm:$0xff]
    %v177 = vld [vmem:[#allocation2 + $0x1f0] sm:$0xff]
    %v178 = vld [vmem:[#allocation2 + $0x1f8] sm:$0xff]
    %v179 = vld [vmem:[#allocation3] sm:$0xff]
    %v180 = vld [vmem:[#allocation3 + $0x8] sm:$0xff]
    %v181 = vld [vmem:[#allocation3 + $0x10] sm:$0xff]
    %v182 = vld [vmem:[#allocation3 + $0x18] sm:$0xff]
    %v183 = vld [vmem:[#allocation3 + $0x20] sm:$0xff]
    %v184 = vld [vmem:[#allocation3 + $0x28] sm:$0xff]
    %v185 = vld [vmem:[#allocation3 + $0x30] sm:$0xff]
    %v186 = vld [vmem:[#allocation3 + $0x38] sm:$0xff]
    %v187 = vld [vmem:[#allocation3 + $0x40] sm:$0xff]
    %v188 = vld [vmem:[#allocation3 + $0x48] sm:$0xff]
    %v189 = vld [vmem:[#allocation3 + $0x50] sm:$0xff]
    %v190 = vld [vmem:[#allocation3 + $0x58] sm:$0xff]
    %v191 = vld [vmem:[#allocation3 + $0x60] sm:$0xff]
    %v192 = vld [vmem:[#allocation3 + $0x68] sm:$0xff]
    %v193 = vld [vmem:[#allocation3 + $0x70] sm:$0xff]
    %v194 = vld [vmem:[#allocation3 + $0x78] sm:$0xff]
    %v195 = vld [vmem:[#allocation3 + $0x80] sm:$0xff]
    %v196 = vld [vmem:[#allocation3 + $0x88] sm:$0xff]
    %v197 = vld [vmem:[#allocation3 + $0x90] sm:$0xff]
    %v198 = vld [vmem:[#allocation3 + $0x98] sm:$0xff]
    %v199 = vld [vmem:[#allocation3 + $0xa0] sm:$0xff]
    %v200 = vld [vmem:[#allocation3 + $0xa8] sm:$0xff]
    %v201 = vld [vmem:[#allocation3 + $0xb0] sm:$0xff]
    %v202 = vld [vmem:[#allocation3 + $0xb8] sm:$0xff]
    %v203 = vld [vmem:[#allocation3 + $0xc0] sm:$0xff]
    %v204 = vld [vmem:[#allocation3 + $0xc8] sm:$0xff]
    %v205 = vld [vmem:[#allocation3 + $0xd0] sm:$0xff]
    %v206 = vld [vmem:[#allocation3 + $0xd8] sm:$0xff]
    %v207 = vld [vmem:[#allocation3 + $0xe0] sm:$0xff]
    %v208 = vld [vmem:[#allocation3 + $0xe8] sm:$0xff]
    %v209 = vld [vmem:[#allocation3 + $0xf0] sm:$0xff]
    %v210 = vld [vmem:[#allocation3 + $0xf8] sm:$0xff]
    %v211 = vld [vmem:[#allocation3 + $0x100] sm:$0xff]
    %v212 = vld [vmem:[#allocation3 + $0x108] sm:$0xff]
    %v213 = vld [vmem:[#allocation3 + $0x110] sm:$0xff]
    %v214 = vld [vmem:[#allocation3 + $0x118] sm:$0xff]
    %v215 = vld [vmem:[#allocation3 + $0x120] sm:$0xff]
    %v216 = vld [vmem:[#allocation3 + $0x128] sm:$0xff]
    %v217 = vld [vmem:[#allocation3 + $0x130] sm:$0xff]
    %v218 = vld [vmem:[#allocation3 + $0x138] sm:$0xff]
    %v219 = vld [vmem:[#allocation3 + $0x140] sm:$0xff]
    %v220 = vld [vmem:[#allocation3 + $0x148] sm:$0xff]
    %v221 = vld [vmem:[#allocation3 + $0x150] sm:$0xff]
    %v222 = vld [vmem:[#allocation3 + $0x158] sm:$0xff]
    %v223 = vld [vmem:[#allocation3 + $0x160] sm:$0xff]
    %v224 = vld [vmem:[#allocation3 + $0x168] sm:$0xff]
    %v225 = vld [vmem:[#allocation3 + $0x170] sm:$0xff]
    %v226 = vld [vmem:[#allocation3 + $0x178] sm:$0xff]
    %v227 = vld [vmem:[#allocation3 + $0x180] sm:$0xff]
    %v228 = vld [vmem:[#allocation3 + $0x188] sm:$0xff]
    %v229 = vld [vmem:[#allocation3 + $0x190] sm:$0xff]
    %v230 = vld [vmem:[#allocation3 + $0x198] sm:$0xff]
    %v231 = vld [vmem:[#allocation3 + $0x1a0] sm:$0xff]
    %v232 = vld [vmem:[#allocation3 + $0x1a8] sm:$0xff]
    %v233 = vld [vmem:[#allocation3 + $0x1b0] sm:$0xff]
    %v234 = vld [vmem:[#allocation3 + $0x1b8] sm:$0xff]
    %v235 = vld [vmem:[#allocation3 + $0x1c0] sm:$0xff]
    %v236 = vld [vmem:[#allocation3 + $0x1c8] sm:$0xff]
    %v237 = vld [vmem:[#allocation3 + $0x1d0] sm:$0xff]
    %v238 = vld [vmem:[#allocation3 + $0x1d8] sm:$0xff]
    %v239 = vld [vmem:[#allocation3 + $0x1e0] sm:$0xff]
    %v240 = vld [vmem:[#allocation3 + $0x1e8] sm:$0xff]
    %v241 = vld [vmem:[#allocation3 + $0x1f0] sm:$0xff]
    %v242 = vld [vmem:[#allocation3 + $0x1f8] sm:$0xff]
    %v243 = vld [vmem:[#allocation6] sm:$0xf]
    %v244 = vld [vmem:[#allocation6 + $0x4] sm:$0xf]
    %v245 = vld [vmem:[#allocation6 + $0x8] sm:$0xf]
    %v246 = vld [vmem:[#allocation6 + $0xc] sm:$0xf]
    %v247 = vld [vmem:[#allocation6 + $0x10] sm:$0xf]
    %v248 = vld [vmem:[#allocation6 + $0x14] sm:$0xf]
    %v249 = vld [vmem:[#allocation6 + $0x18] sm:$0xf]
    %v250 = vld [vmem:[#allocation6 + $0x1c] sm:$0xf]
    %v251 = vld [vmem:[#allocation6 + $0x20] sm:$0xf]
    %v252 = vld [vmem:[#allocation6 + $0x24] sm:$0xf]
    %v253 = vld [vmem:[#allocation6 + $0x28] sm:$0xf]
    %v254 = vld [vmem:[#allocation6 + $0x2c] sm:$0xf]
    %v255 = vld [vmem:[#allocation6 + $0x30] sm:$0xf]
    %v256 = vld [vmem:[#allocation6 + $0x34] sm:$0xf]
    %v257 = vld [vmem:[#allocation6 + $0x38] sm:$0xf]
    %v258 = vld [vmem:[#allocation6 + $0x3c] sm:$0xf]
    %v259 = vld [vmem:[#allocation6 + $0x40] sm:$0xf]
    %v260 = vld [vmem:[#allocation6 + $0x44] sm:$0xf]
    %v261 = vld [vmem:[#allocation6 + $0x48] sm:$0xf]
    %v262 = vld [vmem:[#allocation6 + $0x4c] sm:$0xf]
    %v263 = vld [vmem:[#allocation6 + $0x50] sm:$0xf]
    %v264 = vld [vmem:[#allocation6 + $0x54] sm:$0xf]
    %v265 = vld [vmem:[#allocation6 + $0x58] sm:$0xf]
    %v266 = vld [vmem:[#allocation6 + $0x5c] sm:$0xf]
    %v267 = vld [vmem:[#allocation6 + $0x60] sm:$0xf]
    %v268 = vld [vmem:[#allocation6 + $0x64] sm:$0xf]
    %v269 = vld [vmem:[#allocation6 + $0x68] sm:$0xf]
    %v270 = vld [vmem:[#allocation6 + $0x6c] sm:$0xf]
    %v271 = vld [vmem:[#allocation6 + $0x70] sm:$0xf]
    %v272 = vld [vmem:[#allocation6 + $0x74] sm:$0xf]
    %v273 = vld [vmem:[#allocation6 + $0x78] sm:$0xf]
    %v274 = vld [vmem:[#allocation6 + $0x7c] sm:$0xf]
    %v339 = vunpack.c.l.b16 %v179
    %v340 = vunpack.c.h.b16 %v179
    %v341 = vunpack.c.l.b16 %v180
    %v342 = vunpack.c.h.b16 %v180
    %v343 = vunpack.c.l.b16 %v181
    %v344 = vunpack.c.h.b16 %v181
    %v345 = vunpack.c.l.b16 %v182
    %v346 = vunpack.c.h.b16 %v182
    %v347 = vunpack.c.l.b16 %v183
    %v348 = vunpack.c.h.b16 %v183
    %v349 = vunpack.c.l.b16 %v184
    %v350 = vunpack.c.h.b16 %v184
    %v351 = vunpack.c.l.b16 %v185
    %v352 = vunpack.c.h.b16 %v185
    %v353 = vunpack.c.l.b16 %v186
    %v354 = vunpack.c.h.b16 %v186
    %v355 = vunpack.c.l.b16 %v187
    %v356 = vunpack.c.h.b16 %v187
    %v357 = vunpack.c.l.b16 %v188
    %v358 = vunpack.c.h.b16 %v188
    %v359 = vunpack.c.l.b16 %v189
    %v360 = vunpack.c.h.b16 %v189
    %v361 = vunpack.c.l.b16 %v190
    %v362 = vunpack.c.h.b16 %v190
    %v363 = vunpack.c.l.b16 %v191
    %v364 = vunpack.c.h.b16 %v191
    %v365 = vunpack.c.l.b16 %v192
    %v366 = vunpack.c.h.b16 %v192
    %v367 = vunpack.c.l.b16 %v193
    %v368 = vunpack.c.h.b16 %v193
    %v369 = vunpack.c.l.b16 %v194
    %v370 = vunpack.c.h.b16 %v194
    %v371 = vunpack.c.l.b16 %v195
    %v372 = vunpack.c.h.b16 %v195
    %v373 = vunpack.c.l.b16 %v196
    %v374 = vunpack.c.h.b16 %v196
    %v375 = vunpack.c.l.b16 %v197
    %v376 = vunpack.c.h.b16 %v197
    %v377 = vunpack.c.l.b16 %v198
    %v378 = vunpack.c.h.b16 %v198
    %v379 = vunpack.c.l.b16 %v199
    %v380 = vunpack.c.h.b16 %v199
    %v381 = vunpack.c.l.b16 %v200
    %v382 = vunpack.c.h.b16 %v200
    %v383 = vunpack.c.l.b16 %v201
    %v384 = vunpack.c.h.b16 %v201
    %v385 = vunpack.c.l.b16 %v202
    %v386 = vunpack.c.h.b16 %v202
    %v387 = vunpack.c.l.b16 %v203
    %v388 = vunpack.c.h.b16 %v203
    %v389 = vunpack.c.l.b16 %v204
    %v390 = vunpack.c.h.b16 %v204
    %v391 = vunpack.c.l.b16 %v205
    %v392 = vunpack.c.h.b16 %v205
    %v393 = vunpack.c.l.b16 %v206
    %v394 = vunpack.c.h.b16 %v206
    %v395 = vunpack.c.l.b16 %v207
    %v396 = vunpack.c.h.b16 %v207
    %v397 = vunpack.c.l.b16 %v208
    %v398 = vunpack.c.h.b16 %v208
    %v399 = vunpack.c.l.b16 %v209
    %v400 = vunpack.c.h.b16 %v209
    %v401 = vunpack.c.l.b16 %v210
    %v402 = vunpack.c.h.b16 %v210
    %v403 = vunpack.c.l.b16 %v211
    %v404 = vunpack.c.h.b16 %v211
    %v405 = vunpack.c.l.b16 %v212
    %v406 = vunpack.c.h.b16 %v212
    %v407 = vunpack.c.l.b16 %v213
    %v408 = vunpack.c.h.b16 %v213
    %v409 = vunpack.c.l.b16 %v214
    %v410 = vunpack.c.h.b16 %v214
    %v411 = vunpack.c.l.b16 %v215
    %v412 = vunpack.c.h.b16 %v215
    %v413 = vunpack.c.l.b16 %v216
    %v414 = vunpack.c.h.b16 %v216
    %v415 = vunpack.c.l.b16 %v217
    %v416 = vunpack.c.h.b16 %v217
    %v417 = vunpack.c.l.b16 %v218
    %v418 = vunpack.c.h.b16 %v218
    %v419 = vunpack.c.l.b16 %v219
    %v420 = vunpack.c.h.b16 %v219
    %v421 = vunpack.c.l.b16 %v220
    %v422 = vunpack.c.h.b16 %v220
    %v423 = vunpack.c.l.b16 %v221
    %v424 = vunpack.c.h.b16 %v221
    %v425 = vunpack.c.l.b16 %v222
    %v426 = vunpack.c.h.b16 %v222
    %v427 = vunpack.c.l.b16 %v223
    %v428 = vunpack.c.h.b16 %v223
    %v429 = vunpack.c.l.b16 %v224
    %v430 = vunpack.c.h.b16 %v224
    %v431 = vunpack.c.l.b16 %v225
    %v432 = vunpack.c.h.b16 %v225
    %v433 = vunpack.c.l.b16 %v226
    %v434 = vunpack.c.h.b16 %v226
    %v435 = vunpack.c.l.b16 %v227
    %v436 = vunpack.c.h.b16 %v227
    %v437 = vunpack.c.l.b16 %v228
    %v438 = vunpack.c.h.b16 %v228
    %v439 = vunpack.c.l.b16 %v229
    %v440 = vunpack.c.h.b16 %v229
    %v441 = vunpack.c.l.b16 %v230
    %v442 = vunpack.c.h.b16 %v230
    %v443 = vunpack.c.l.b16 %v231
    %v444 = vunpack.c.h.b16 %v231
    %v445 = vunpack.c.l.b16 %v232
    %v446 = vunpack.c.h.b16 %v232
    %v447 = vunpack.c.l.b16 %v233
    %v448 = vunpack.c.h.b16 %v233
    %v449 = vunpack.c.l.b16 %v234
    %v450 = vunpack.c.h.b16 %v234
    %v451 = vunpack.c.l.b16 %v235
    %v452 = vunpack.c.h.b16 %v235
    %v453 = vunpack.c.l.b16 %v236
    %v454 = vunpack.c.h.b16 %v236
    %v455 = vunpack.c.l.b16 %v237
    %v456 = vunpack.c.h.b16 %v237
    %v457 = vunpack.c.l.b16 %v238
    %v458 = vunpack.c.h.b16 %v238
    %v459 = vunpack.c.l.b16 %v239
    %v460 = vunpack.c.h.b16 %v239
    %v461 = vunpack.c.l.b16 %v240
    %v462 = vunpack.c.h.b16 %v240
    %v463 = vunpack.c.l.b16 %v241
    %v464 = vunpack.c.h.b16 %v241
    %v465 = vunpack.c.l.b16 %v242
    %v466 = vunpack.c.h.b16 %v242
    %v467 = vpack.c.b16 %v341, %v339
    %v468 = vpack.c.b16 %v342, %v340
    %v469 = vpack.c.b16 %v345, %v343
    %v470 = vpack.c.b16 %v346, %v344
    %v471 = vpack.c.b16 %v349, %v347
    %v472 = vpack.c.b16 %v350, %v348
    %v473 = vpack.c.b16 %v353, %v351
    %v474 = vpack.c.b16 %v354, %v352
    %v475 = vpack.c.b16 %v357, %v355
    %v476 = vpack.c.b16 %v358, %v356
    %v477 = vpack.c.b16 %v361, %v359
    %v478 = vpack.c.b16 %v362, %v360
    %v479 = vpack.c.b16 %v365, %v363
    %v480 = vpack.c.b16 %v366, %v364
    %v481 = vpack.c.b16 %v369, %v367
    %v482 = vpack.c.b16 %v370, %v368
    %v483 = vpack.c.b16 %v373, %v371
    %v484 = vpack.c.b16 %v374, %v372
    %v485 = vpack.c.b16 %v377, %v375
    %v486 = vpack.c.b16 %v378, %v376
    %v487 = vpack.c.b16 %v381, %v379
    %v488 = vpack.c.b16 %v382, %v380
    %v489 = vpack.c.b16 %v385, %v383
    %v490 = vpack.c.b16 %v386, %v384
    %v491 = vpack.c.b16 %v389, %v387
    %v492 = vpack.c.b16 %v390, %v388
    %v493 = vpack.c.b16 %v393, %v391
    %v494 = vpack.c.b16 %v394, %v392
    %v495 = vpack.c.b16 %v397, %v395
    %v496 = vpack.c.b16 %v398, %v396
    %v497 = vpack.c.b16 %v401, %v399
    %v498 = vpack.c.b16 %v402, %v400
    %v499 = vpack.c.b16 %v405, %v403
    %v500 = vpack.c.b16 %v406, %v404
    %v501 = vpack.c.b16 %v409, %v407
    %v502 = vpack.c.b16 %v410, %v408
    %v503 = vpack.c.b16 %v413, %v411
    %v504 = vpack.c.b16 %v414, %v412
    %v505 = vpack.c.b16 %v417, %v415
    %v506 = vpack.c.b16 %v418, %v416
    %v507 = vpack.c.b16 %v421, %v419
    %v508 = vpack.c.b16 %v422, %v420
    %v509 = vpack.c.b16 %v425, %v423
    %v510 = vpack.c.b16 %v426, %v424
    %v511 = vpack.c.b16 %v429, %v427
    %v512 = vpack.c.b16 %v430, %v428
    %v513 = vpack.c.b16 %v433, %v431
    %v514 = vpack.c.b16 %v434, %v432
    %v515 = vpack.c.b16 %v437, %v435
    %v516 = vpack.c.b16 %v438, %v436
    %v517 = vpack.c.b16 %v441, %v439
    %v518 = vpack.c.b16 %v442, %v440
    %v519 = vpack.c.b16 %v445, %v443
    %v520 = vpack.c.b16 %v446, %v444
    %v521 = vpack.c.b16 %v449, %v447
    %v522 = vpack.c.b16 %v450, %v448
    %v523 = vpack.c.b16 %v453, %v451
    %v524 = vpack.c.b16 %v454, %v452
    %v525 = vpack.c.b16 %v457, %v455
    %v526 = vpack.c.b16 %v458, %v456
    %v527 = vpack.c.b16 %v461, %v459
    %v528 = vpack.c.b16 %v462, %v460
    %v529 = vpack.c.b16 %v465, %v463
    %v530 = vpack.c.b16 %v466, %v464
    %v627 = vunpack.c.l.b16 %v243
    %v628 = vunpack.c.l.b16 %v244
    %v629 = vunpack.c.l.b16 %v245
    %v630 = vunpack.c.l.b16 %v246
    %v631 = vunpack.c.l.b16 %v247
    %v632 = vunpack.c.l.b16 %v248
    %v633 = vunpack.c.l.b16 %v249
    %v634 = vunpack.c.l.b16 %v250
    %v635 = vunpack.c.l.b16 %v251
    %v636 = vunpack.c.l.b16 %v252
    %v637 = vunpack.c.l.b16 %v253
    %v638 = vunpack.c.l.b16 %v254
    %v639 = vunpack.c.l.b16 %v255
    %v640 = vunpack.c.l.b16 %v256
    %v641 = vunpack.c.l.b16 %v257
    %v642 = vunpack.c.l.b16 %v258
    %v643 = vunpack.c.l.b16 %v259
    %v644 = vunpack.c.l.b16 %v260
    %v645 = vunpack.c.l.b16 %v261
    %v646 = vunpack.c.l.b16 %v262
    %v647 = vunpack.c.l.b16 %v263
    %v648 = vunpack.c.l.b16 %v264
    %v649 = vunpack.c.l.b16 %v265
    %v650 = vunpack.c.l.b16 %v266
    %v651 = vunpack.c.l.b16 %v267
    %v652 = vunpack.c.l.b16 %v268
    %v653 = vunpack.c.l.b16 %v269
    %v654 = vunpack.c.l.b16 %v270
    %v655 = vunpack.c.l.b16 %v271
    %v656 = vunpack.c.l.b16 %v272
    %v657 = vunpack.c.l.b16 %v273
    %v658 = vunpack.c.l.b16 %v274
    %v659 = vpack.c.b16 %v628, %v627
    %v660 = vpack.c.b16 %v630, %v629
    %v661 = vpack.c.b16 %v632, %v631
    %v662 = vpack.c.b16 %v634, %v633
    %v663 = vpack.c.b16 %v636, %v635
    %v664 = vpack.c.b16 %v638, %v637
    %v665 = vpack.c.b16 %v640, %v639
    %v666 = vpack.c.b16 %v642, %v641
    %v667 = vpack.c.b16 %v644, %v643
    %v668 = vpack.c.b16 %v646, %v645
    %v669 = vpack.c.b16 %v648, %v647
    %v670 = vpack.c.b16 %v650, %v649
    %v671 = vpack.c.b16 %v652, %v651
    %v672 = vpack.c.b16 %v654, %v653
    %v673 = vpack.c.b16 %v656, %v655
    %v674 = vpack.c.b16 %v658, %v657
    %691 = vmatpush.bf16.msra.mxu0 %v666
    %692 = vmatpush.bf16.msra.mxu0 %v665
    %693 = vmatpush.bf16.msra.mxu0 %v664
    %694 = vmatpush.bf16.msra.mxu0 %v663
    %695 = vmatpush.bf16.msra.mxu0 %v662
    %696 = vmatpush.bf16.msra.mxu0 %v661
    %697 = vmatpush.bf16.msra.mxu0 %v660
    %698 = vmatpush.bf16.msra.mxu0 %v659
    %699 = vmatmul.bf16.gmra.mxu0 %v467
    %v700 = vpop.f32.mrf.mxu0
    %v701 = vadd.f32 0.0, %v700
    %v702 = vpop.f32.mrf.mxu0
    %v703 = vadd.f32 0.0, %v702
    %704 = vmatmul.bf16.gmra.mxu0 %v469
    %v705 = vpop.f32.mrf.mxu0
    %v706 = vadd.f32 0.0, %v705
    %v707 = vpop.f32.mrf.mxu0
    %v708 = vadd.f32 0.0, %v707
    %709 = vmatmul.bf16.gmra.mxu0 %v471
    %v710 = vpop.f32.mrf.mxu0
    %v711 = vadd.f32 0.0, %v710
    %v712 = vpop.f32.mrf.mxu0
    %v713 = vadd.f32 0.0, %v712
    %714 = vmatmul.bf16.gmra.mxu0 %v473
    %v715 = vpop.f32.mrf.mxu0
    %v716 = vadd.f32 0.0, %v715
    %v717 = vpop.f32.mrf.mxu0
    %v718 = vadd.f32 0.0, %v717
    %719 = vmatmul.bf16.gmra.mxu0 %v475
    %v720 = vpop.f32.mrf.mxu0
    %v721 = vadd.f32 0.0, %v720
    %v722 = vpop.f32.mrf.mxu0
    %v723 = vadd.f32 0.0, %v722
    %724 = vmatmul.bf16.gmra.mxu0 %v477
    %v725 = vpop.f32.mrf.mxu0
    %v726 = vadd.f32 0.0, %v725
    %v727 = vpop.f32.mrf.mxu0
    %v728 = vadd.f32 0.0, %v727
    %729 = vmatmul.bf16.gmra.mxu0 %v479
    %v730 = vpop.f32.mrf.mxu0
    %v731 = vadd.f32 0.0, %v730
    %v732 = vpop.f32.mrf.mxu0
    %v733 = vadd.f32 0.0, %v732
    %734 = vmatmul.bf16.gmra.mxu0 %v481
    %v735 = vpop.f32.mrf.mxu0
    %v736 = vadd.f32 0.0, %v735
    %v737 = vpop.f32.mrf.mxu0
    %v738 = vadd.f32 0.0, %v737
    %739 = vmatmul.bf16.gmra.mxu0 %v483
    %v740 = vpop.f32.mrf.mxu0
    %v741 = vadd.f32 0.0, %v740
    %v742 = vpop.f32.mrf.mxu0
    %v743 = vadd.f32 0.0, %v742
    %744 = vmatmul.bf16.gmra.mxu0 %v485
    %v745 = vpop.f32.mrf.mxu0
    %v746 = vadd.f32 0.0, %v745
    %v747 = vpop.f32.mrf.mxu0
    %v748 = vadd.f32 0.0, %v747
    %749 = vmatmul.bf16.gmra.mxu0 %v487
    %v750 = vpop.f32.mrf.mxu0
    %v751 = vadd.f32 0.0, %v750
    %v752 = vpop.f32.mrf.mxu0
    %v753 = vadd.f32 0.0, %v752
    %754 = vmatmul.bf16.gmra.mxu0 %v489
    %v755 = vpop.f32.mrf.mxu0
    %v756 = vadd.f32 0.0, %v755
    %v757 = vpop.f32.mrf.mxu0
    %v758 = vadd.f32 0.0, %v757
    %759 = vmatmul.bf16.gmra.mxu0 %v491
    %v760 = vpop.f32.mrf.mxu0
    %v761 = vadd.f32 0.0, %v760
    %v762 = vpop.f32.mrf.mxu0
    %v763 = vadd.f32 0.0, %v762
    %764 = vmatmul.bf16.gmra.mxu0 %v493
    %v765 = vpop.f32.mrf.mxu0
    %v766 = vadd.f32 0.0, %v765
    %v767 = vpop.f32.mrf.mxu0
    %v768 = vadd.f32 0.0, %v767
    %769 = vmatmul.bf16.gmra.mxu0 %v495
    %v770 = vpop.f32.mrf.mxu0
    %v771 = vadd.f32 0.0, %v770
    %v772 = vpop.f32.mrf.mxu0
    %v773 = vadd.f32 0.0, %v772
    %774 = vmatmul.bf16.gmra.mxu0 %v497
    %v775 = vpop.f32.mrf.mxu0
    %v776 = vadd.f32 0.0, %v775
    %v777 = vpop.f32.mrf.mxu0
    %v778 = vadd.f32 0.0, %v777
    %779 = vmatmul.bf16.gmra.mxu0 %v499
    %v780 = vpop.f32.mrf.mxu0
    %v781 = vadd.f32 0.0, %v780
    %v782 = vpop.f32.mrf.mxu0
    %v783 = vadd.f32 0.0, %v782
    %784 = vmatmul.bf16.gmra.mxu0 %v501
    %v785 = vpop.f32.mrf.mxu0
    %v786 = vadd.f32 0.0, %v785
    %v787 = vpop.f32.mrf.mxu0
    %v788 = vadd.f32 0.0, %v787
    %789 = vmatmul.bf16.gmra.mxu0 %v503
    %v790 = vpop.f32.mrf.mxu0
    %v791 = vadd.f32 0.0, %v790
    %v792 = vpop.f32.mrf.mxu0
    %v793 = vadd.f32 0.0, %v792
    %794 = vmatmul.bf16.gmra.mxu0 %v505
    %v795 = vpop.f32.mrf.mxu0
    %v796 = vadd.f32 0.0, %v795
    %v797 = vpop.f32.mrf.mxu0
    %v798 = vadd.f32 0.0, %v797
    %799 = vmatmul.bf16.gmra.mxu0 %v507
    %v800 = vpop.f32.mrf.mxu0
    %v801 = vadd.f32 0.0, %v800
    %v802 = vpop.f32.mrf.mxu0
    %v803 = vadd.f32 0.0, %v802
    %804 = vmatmul.bf16.gmra.mxu0 %v509
    %v805 = vpop.f32.mrf.mxu0
    %v806 = vadd.f32 0.0, %v805
    %v807 = vpop.f32.mrf.mxu0
    %v808 = vadd.f32 0.0, %v807
    %809 = vmatmul.bf16.gmra.mxu0 %v511
    %v810 = vpop.f32.mrf.mxu0
    %v811 = vadd.f32 0.0, %v810
    %v812 = vpop.f32.mrf.mxu0
    %v813 = vadd.f32 0.0, %v812
    %814 = vmatmul.bf16.gmra.mxu0 %v513
    %v815 = vpop.f32.mrf.mxu0
    %v816 = vadd.f32 0.0, %v815
    %v817 = vpop.f32.mrf.mxu0
    %v818 = vadd.f32 0.0, %v817
    %819 = vmatmul.bf16.gmra.mxu0 %v515
    %v820 = vpop.f32.mrf.mxu0
    %v821 = vadd.f32 0.0, %v820
    %v822 = vpop.f32.mrf.mxu0
    %v823 = vadd.f32 0.0, %v822
    %824 = vmatmul.bf16.gmra.mxu0 %v517
    %v825 = vpop.f32.mrf.mxu0
    %v826 = vadd.f32 0.0, %v825
    %v827 = vpop.f32.mrf.mxu0
    %v828 = vadd.f32 0.0, %v827
    %829 = vmatmul.bf16.gmra.mxu0 %v519
    %v830 = vpop.f32.mrf.mxu0
    %v831 = vadd.f32 0.0, %v830
    %v832 = vpop.f32.mrf.mxu0
    %v833 = vadd.f32 0.0, %v832
    %834 = vmatmul.bf16.gmra.mxu0 %v521
    %v835 = vpop.f32.mrf.mxu0
    %v836 = vadd.f32 0.0, %v835
    %v837 = vpop.f32.mrf.mxu0
    %v838 = vadd.f32 0.0, %v837
    %839 = vmatmul.bf16.gmra.mxu0 %v523
    %v840 = vpop.f32.mrf.mxu0
    %v841 = vadd.f32 0.0, %v840
    %v842 = vpop.f32.mrf.mxu0
    %v843 = vadd.f32 0.0, %v842
    %844 = vmatmul.bf16.gmra.mxu0 %v525
    %v845 = vpop.f32.mrf.mxu0
    %v846 = vadd.f32 0.0, %v845
    %v847 = vpop.f32.mrf.mxu0
    %v848 = vadd.f32 0.0, %v847
    %849 = vmatmul.bf16.gmra.mxu0 %v527
    %v850 = vpop.f32.mrf.mxu0
    %v851 = vadd.f32 0.0, %v850
    %v852 = vpop.f32.mrf.mxu0
    %v853 = vadd.f32 0.0, %v852
    %854 = vmatmul.bf16.gmra.mxu0 %v529
    %v855 = vpop.f32.mrf.mxu0
    %v856 = vadd.f32 0.0, %v855
    %v857 = vpop.f32.mrf.mxu0
    %v858 = vadd.f32 0.0, %v857
    %859 = vdwg.mxu0
    %860 = vmatpush.bf16.msra.mxu0 %v674
    %861 = vmatpush.bf16.msra.mxu0 %v673
    %862 = vmatpush.bf16.msra.mxu0 %v672
    %863 = vmatpush.bf16.msra.mxu0 %v671
    %864 = vmatpush.bf16.msra.mxu0 %v670
    %865 = vmatpush.bf16.msra.mxu0 %v669
    %866 = vmatpush.bf16.msra.mxu0 %v668
    %867 = vmatpush.bf16.msra.mxu0 %v667
    %868 = vmatmul.bf16.gmra.mxu0 %v468
    %v869 = vpop.f32.mrf.mxu0
    %v870 = vadd.f32 %v701, %v869
    %v871 = vpop.f32.mrf.mxu0
    %v872 = vadd.f32 %v703, %v871
    %873 = vmatmul.bf16.gmra.mxu0 %v470
    %v874 = vpop.f32.mrf.mxu0
    %v875 = vadd.f32 %v706, %v874
    %v876 = vpop.f32.mrf.mxu0
    %v877 = vadd.f32 %v708, %v876
    %878 = vmatmul.bf16.gmra.mxu0 %v472
    %v879 = vpop.f32.mrf.mxu0
    %v880 = vadd.f32 %v711, %v879
    %v881 = vpop.f32.mrf.mxu0
    %v882 = vadd.f32 %v713, %v881
    %883 = vmatmul.bf16.gmra.mxu0 %v474
    %v884 = vpop.f32.mrf.mxu0
    %v885 = vadd.f32 %v716, %v884
    %v886 = vpop.f32.mrf.mxu0
    %v887 = vadd.f32 %v718, %v886
    %888 = vmatmul.bf16.gmra.mxu0 %v476
    %v889 = vpop.f32.mrf.mxu0
    %v890 = vadd.f32 %v721, %v889
    %v891 = vpop.f32.mrf.mxu0
    %v892 = vadd.f32 %v723, %v891
    %893 = vmatmul.bf16.gmra.mxu0 %v478
    %v894 = vpop.f32.mrf.mxu0
    %v895 = vadd.f32 %v726, %v894
    %v896 = vpop.f32.mrf.mxu0
    %v897 = vadd.f32 %v728, %v896
    %898 = vmatmul.bf16.gmra.mxu0 %v480
    %v899 = vpop.f32.mrf.mxu0
    %v900 = vadd.f32 %v731, %v899
    %v901 = vpop.f32.mrf.mxu0
    %v902 = vadd.f32 %v733, %v901
    %903 = vmatmul.bf16.gmra.mxu0 %v482
    %v904 = vpop.f32.mrf.mxu0
    %v905 = vadd.f32 %v736, %v904
    %v906 = vpop.f32.mrf.mxu0
    %v907 = vadd.f32 %v738, %v906
    %908 = vmatmul.bf16.gmra.mxu0 %v484
    %v909 = vpop.f32.mrf.mxu0
    %v910 = vadd.f32 %v741, %v909
    %v911 = vpop.f32.mrf.mxu0
    %v912 = vadd.f32 %v743, %v911
    %913 = vmatmul.bf16.gmra.mxu0 %v486
    %v914 = vpop.f32.mrf.mxu0
    %v915 = vadd.f32 %v746, %v914
    %v916 = vpop.f32.mrf.mxu0
    %v917 = vadd.f32 %v748, %v916
    %918 = vmatmul.bf16.gmra.mxu0 %v488
    %v919 = vpop.f32.mrf.mxu0
    %v920 = vadd.f32 %v751, %v919
    %v921 = vpop.f32.mrf.mxu0
    %v922 = vadd.f32 %v753, %v921
    %923 = vmatmul.bf16.gmra.mxu0 %v490
    %v924 = vpop.f32.mrf.mxu0
    %v925 = vadd.f32 %v756, %v924
    %v926 = vpop.f32.mrf.mxu0
    %v927 = vadd.f32 %v758, %v926
    %928 = vmatmul.bf16.gmra.mxu0 %v492
    %v929 = vpop.f32.mrf.mxu0
    %v930 = vadd.f32 %v761, %v929
    %v931 = vpop.f32.mrf.mxu0
    %v932 = vadd.f32 %v763, %v931
    %933 = vmatmul.bf16.gmra.mxu0 %v494
    %v934 = vpop.f32.mrf.mxu0
    %v935 = vadd.f32 %v766, %v934
    %v936 = vpop.f32.mrf.mxu0
    %v937 = vadd.f32 %v768, %v936
    %938 = vmatmul.bf16.gmra.mxu0 %v496
    %v939 = vpop.f32.mrf.mxu0
    %v940 = vadd.f32 %v771, %v939
    %v941 = vpop.f32.mrf.mxu0
    %v942 = vadd.f32 %v773, %v941
    %943 = vmatmul.bf16.gmra.mxu0 %v498
    %v944 = vpop.f32.mrf.mxu0
    %v945 = vadd.f32 %v776, %v944
    %v946 = vpop.f32.mrf.mxu0
    %v947 = vadd.f32 %v778, %v946
    %948 = vmatmul.bf16.gmra.mxu0 %v500
    %v949 = vpop.f32.mrf.mxu0
    %v950 = vadd.f32 %v781, %v949
    %v951 = vpop.f32.mrf.mxu0
    %v952 = vadd.f32 %v783, %v951
    %953 = vmatmul.bf16.gmra.mxu0 %v502
    %v954 = vpop.f32.mrf.mxu0
    %v955 = vadd.f32 %v786, %v954
    %v956 = vpop.f32.mrf.mxu0
    %v957 = vadd.f32 %v788, %v956
    %958 = vmatmul.bf16.gmra.mxu0 %v504
    %v959 = vpop.f32.mrf.mxu0
    %v960 = vadd.f32 %v791, %v959
    %v961 = vpop.f32.mrf.mxu0
    %v962 = vadd.f32 %v793, %v961
    %963 = vmatmul.bf16.gmra.mxu0 %v506
    %v964 = vpop.f32.mrf.mxu0
    %v965 = vadd.f32 %v796, %v964
    %v966 = vpop.f32.mrf.mxu0
    %v967 = vadd.f32 %v798, %v966
    %968 = vmatmul.bf16.gmra.mxu0 %v508
    %v969 = vpop.f32.mrf.mxu0
    %v970 = vadd.f32 %v801, %v969
    %v971 = vpop.f32.mrf.mxu0
    %v972 = vadd.f32 %v803, %v971
    %973 = vmatmul.bf16.gmra.mxu0 %v510
    %v974 = vpop.f32.mrf.mxu0
    %v975 = vadd.f32 %v806, %v974
    %v976 = vpop.f32.mrf.mxu0
    %v977 = vadd.f32 %v808, %v976
    %978 = vmatmul.bf16.gmra.mxu0 %v512
    %v979 = vpop.f32.mrf.mxu0
    %v980 = vadd.f32 %v811, %v979
    %v981 = vpop.f32.mrf.mxu0
    %v982 = vadd.f32 %v813, %v981
    %983 = vmatmul.bf16.gmra.mxu0 %v514
    %v984 = vpop.f32.mrf.mxu0
    %v985 = vadd.f32 %v816, %v984
    %v986 = vpop.f32.mrf.mxu0
    %v987 = vadd.f32 %v818, %v986
    %988 = vmatmul.bf16.gmra.mxu0 %v516
    %v989 = vpop.f32.mrf.mxu0
    %v990 = vadd.f32 %v821, %v989
    %v991 = vpop.f32.mrf.mxu0
    %v992 = vadd.f32 %v823, %v991
    %993 = vmatmul.bf16.gmra.mxu0 %v518
    %v994 = vpop.f32.mrf.mxu0
    %v995 = vadd.f32 %v826, %v994
    %v996 = vpop.f32.mrf.mxu0
    %v997 = vadd.f32 %v828, %v996
    %998 = vmatmul.bf16.gmra.mxu0 %v520
    %v999 = vpop.f32.mrf.mxu0
    %v1000 = vadd.f32 %v831, %v999
    %v1001 = vpop.f32.mrf.mxu0
    %v1002 = vadd.f32 %v833, %v1001
    %1003 = vmatmul.bf16.gmra.mxu0 %v522
    %v1004 = vpop.f32.mrf.mxu0
    %v1005 = vadd.f32 %v836, %v1004
    %v1006 = vpop.f32.mrf.mxu0
    %v1007 = vadd.f32 %v838, %v1006
    %1008 = vmatmul.bf16.gmra.mxu0 %v524
    %v1009 = vpop.f32.mrf.mxu0
    %v1010 = vadd.f32 %v841, %v1009
    %v1011 = vpop.f32.mrf.mxu0
    %v1012 = vadd.f32 %v843, %v1011
    %1013 = vmatmul.bf16.gmra.mxu0 %v526
    %v1014 = vpop.f32.mrf.mxu0
    %v1015 = vadd.f32 %v846, %v1014
    %v1016 = vpop.f32.mrf.mxu0
    %v1017 = vadd.f32 %v848, %v1016
    %1018 = vmatmul.bf16.gmra.mxu0 %v528
    %v1019 = vpop.f32.mrf.mxu0
    %v1020 = vadd.f32 %v851, %v1019
    %v1021 = vpop.f32.mrf.mxu0
    %v1022 = vadd.f32 %v853, %v1021
    %1023 = vmatmul.bf16.gmra.mxu0 %v530
    %v1024 = vpop.f32.mrf.mxu0
    %v1025 = vadd.f32 %v856, %v1024
    %v1026 = vpop.f32.mrf.mxu0
    %v1027 = vadd.f32 %v858, %v1026
    %1028 = vdwg.mxu0
    %v1029 = vadd.f32 %v115, %v870
    %v1030 = vadd.f32 %v116, %v872
    %v1031 = vadd.f32 %v117, %v875
    %v1032 = vadd.f32 %v118, %v877
    %v1033 = vadd.f32 %v119, %v880
    %v1034 = vadd.f32 %v120, %v882
    %v1035 = vadd.f32 %v121, %v885
    %v1036 = vadd.f32 %v122, %v887
    %v1037 = vadd.f32 %v123, %v890
    %v1038 = vadd.f32 %v124, %v892
    %v1039 = vadd.f32 %v125, %v895
    %v1040 = vadd.f32 %v126, %v897
    %v1041 = vadd.f32 %v127, %v900
    %v1042 = vadd.f32 %v128, %v902
    %v1043 = vadd.f32 %v129, %v905
    %v1044 = vadd.f32 %v130, %v907
    %v1045 = vadd.f32 %v131, %v910
    %v1046 = vadd.f32 %v132, %v912
    %v1047 = vadd.f32 %v133, %v915
    %v1048 = vadd.f32 %v134, %v917
    %v1049 = vadd.f32 %v135, %v920
    %v1050 = vadd.f32 %v136, %v922
    %v1051 = vadd.f32 %v137, %v925
    %v1052 = vadd.f32 %v138, %v927
    %v1053 = vadd.f32 %v139, %v930
    %v1054 = vadd.f32 %v140, %v932
    %v1055 = vadd.f32 %v141, %v935
    %v1056 = vadd.f32 %v142, %v937
    %v1057 = vadd.f32 %v143, %v940
    %v1058 = vadd.f32 %v144, %v942
    %v1059 = vadd.f32 %v145, %v945
    %v1060 = vadd.f32 %v146, %v947
    %v1061 = vadd.f32 %v147, %v950
    %v1062 = vadd.f32 %v148, %v952
    %v1063 = vadd.f32 %v149, %v955
    %v1064 = vadd.f32 %v150, %v957
    %v1065 = vadd.f32 %v151, %v960
    %v1066 = vadd.f32 %v152, %v962
    %v1067 = vadd.f32 %v153, %v965
    %v1068 = vadd.f32 %v154, %v967
    %v1069 = vadd.f32 %v155, %v970
    %v1070 = vadd.f32 %v156, %v972
    %v1071 = vadd.f32 %v157, %v975
    %v1072 = vadd.f32 %v158, %v977
    %v1073 = vadd.f32 %v159, %v980
    %v1074 = vadd.f32 %v160, %v982
    %v1075 = vadd.f32 %v161, %v985
    %v1076 = vadd.f32 %v162, %v987
    %v1077 = vadd.f32 %v163, %v990
    %v1078 = vadd.f32 %v164, %v992
    %v1079 = vadd.f32 %v165, %v995
    %v1080 = vadd.f32 %v166, %v997
    %v1081 = vadd.f32 %v167, %v1000
    %v1082 = vadd.f32 %v168, %v1002
    %v1083 = vadd.f32 %v169, %v1005
    %v1084 = vadd.f32 %v170, %v1007
    %v1085 = vadd.f32 %v171, %v1010
    %v1086 = vadd.f32 %v172, %v1012
    %v1087 = vadd.f32 %v173, %v1015
    %v1088 = vadd.f32 %v174, %v1017
    %v1089 = vadd.f32 %v175, %v1020
    %v1090 = vadd.f32 %v176, %v1022
    %v1091 = vadd.f32 %v177, %v1025
    %v1092 = vadd.f32 %v178, %v1027
    %1093 = vst [vmem:[#allocation2] sm:$0xff] %v1029
    %1094 = vst [vmem:[#allocation2 + $0x8] sm:$0xff] %v1030
    %1095 = vst [vmem:[#allocation2 + $0x10] sm:$0xff] %v1031
    %1096 = vst [vmem:[#allocation2 + $0x18] sm:$0xff] %v1032
    %1097 = vst [vmem:[#allocation2 + $0x20] sm:$0xff] %v1033
    %1098 = vst [vmem:[#allocation2 + $0x28] sm:$0xff] %v1034
    %1099 = vst [vmem:[#allocation2 + $0x30] sm:$0xff] %v1035
    %1100 = vst [vmem:[#allocation2 + $0x38] sm:$0xff] %v1036
    %1101 = vst [vmem:[#allocation2 + $0x40] sm:$0xff] %v1037
    %1102 = vst [vmem:[#allocation2 + $0x48] sm:$0xff] %v1038
    %1103 = vst [vmem:[#allocation2 + $0x50] sm:$0xff] %v1039
    %1104 = vst [vmem:[#allocation2 + $0x58] sm:$0xff] %v1040
    %1105 = vst [vmem:[#allocation2 + $0x60] sm:$0xff] %v1041
    %1106 = vst [vmem:[#allocation2 + $0x68] sm:$0xff] %v1042
    %1107 = vst [vmem:[#allocation2 + $0x70] sm:$0xff] %v1043
    %1108 = vst [vmem:[#allocation2 + $0x78] sm:$0xff] %v1044
    %1109 = vst [vmem:[#allocation2 + $0x80] sm:$0xff] %v1045
    %1110 = vst [vmem:[#allocation2 + $0x88] sm:$0xff] %v1046
    %1111 = vst [vmem:[#allocation2 + $0x90] sm:$0xff] %v1047
    %1112 = vst [vmem:[#allocation2 + $0x98] sm:$0xff] %v1048
    %1113 = vst [vmem:[#allocation2 + $0xa0] sm:$0xff] %v1049
    %1114 = vst [vmem:[#allocation2 + $0xa8] sm:$0xff] %v1050
    %1115 = vst [vmem:[#allocation2 + $0xb0] sm:$0xff] %v1051
    %1116 = vst [vmem:[#allocation2 + $0xb8] sm:$0xff] %v1052
    %1117 = vst [vmem:[#allocation2 + $0xc0] sm:$0xff] %v1053
    %1118 = vst [vmem:[#allocation2 + $0xc8] sm:$0xff] %v1054
    %1119 = vst [vmem:[#allocation2 + $0xd0] sm:$0xff] %v1055
    %1120 = vst [vmem:[#allocation2 + $0xd8] sm:$0xff] %v1056
    %1121 = vst [vmem:[#allocation2 + $0xe0] sm:$0xff] %v1057
    %1122 = vst [vmem:[#allocation2 + $0xe8] sm:$0xff] %v1058
    %1123 = vst [vmem:[#allocation2 + $0xf0] sm:$0xff] %v1059
    %1124 = vst [vmem:[#allocation2 + $0xf8] sm:$0xff] %v1060
    %1125 = vst [vmem:[#allocation2 + $0x100] sm:$0xff] %v1061
    %1126 = vst [vmem:[#allocation2 + $0x108] sm:$0xff] %v1062
    %1127 = vst [vmem:[#allocation2 + $0x110] sm:$0xff] %v1063
    %1128 = vst [vmem:[#allocation2 + $0x118] sm:$0xff] %v1064
    %1129 = vst [vmem:[#allocation2 + $0x120] sm:$0xff] %v1065
    %1130 = vst [vmem:[#allocation2 + $0x128] sm:$0xff] %v1066
    %1131 = vst [vmem:[#allocation2 + $0x130] sm:$0xff] %v1067
    %1132 = vst [vmem:[#allocation2 + $0x138] sm:$0xff] %v1068
    %1133 = vst [vmem:[#allocation2 + $0x140] sm:$0xff] %v1069
    %1134 = vst [vmem:[#allocation2 + $0x148] sm:$0xff] %v1070
    %1135 = vst [vmem:[#allocation2 + $0x150] sm:$0xff] %v1071
    %1136 = vst [vmem:[#allocation2 + $0x158] sm:$0xff] %v1072
    %1137 = vst [vmem:[#allocation2 + $0x160] sm:$0xff] %v1073
    %1138 = vst [vmem:[#allocation2 + $0x168] sm:$0xff] %v1074
    %1139 = vst [vmem:[#allocation2 + $0x170] sm:$0xff] %v1075
    %1140 = vst [vmem:[#allocation2 + $0x178] sm:$0xff] %v1076
    %1141 = vst [vmem:[#allocation2 + $0x180] sm:$0xff] %v1077
    %1142 = vst [vmem:[#allocation2 + $0x188] sm:$0xff] %v1078
    %1143 = vst [vmem:[#allocation2 + $0x190] sm:$0xff] %v1079
    %1144 = vst [vmem:[#allocation2 + $0x198] sm:$0xff] %v1080
    %1145 = vst [vmem:[#allocation2 + $0x1a0] sm:$0xff] %v1081
    %1146 = vst [vmem:[#allocation2 + $0x1a8] sm:$0xff] %v1082
    %1147 = vst [vmem:[#allocation2 + $0x1b0] sm:$0xff] %v1083
    %1148 = vst [vmem:[#allocation2 + $0x1b8] sm:$0xff] %v1084
    %1149 = vst [vmem:[#allocation2 + $0x1c0] sm:$0xff] %v1085
    %1150 = vst [vmem:[#allocation2 + $0x1c8] sm:$0xff] %v1086
    %1151 = vst [vmem:[#allocation2 + $0x1d0] sm:$0xff] %v1087
    %1152 = vst [vmem:[#allocation2 + $0x1d8] sm:$0xff] %v1088
    %1153 = vst [vmem:[#allocation2 + $0x1e0] sm:$0xff] %v1089
    %1154 = vst [vmem:[#allocation2 + $0x1e8] sm:$0xff] %v1090
    %1155 = vst [vmem:[#allocation2 + $0x1f0] sm:$0xff] %v1091
    %1156 = vst [vmem:[#allocation2 + $0x1f8] sm:$0xff] %v1092
    %p1157 = scmp.eq.s32.totalorder 0, 0
    %p1158 = pnand %p47, %p1157
    %p1159 = pneg %p1158
    // Predicated region
    $region22: #{tpu_custom_call.1} parent=1 // pred_check
      _
    $region23: #{tpu_custom_call.1} parent=1 // pred_check_branch
      %1161 = sbr.rel (%p1158) target = $region25
    $region24: #{tpu_custom_call.1} parent=1 // pred_region
      %1162 = vst [vmem:[#allocation9] sm:$0xff] 0.0
    $region25: #{tpu_custom_call.1} parent=1 // pred_fallthru
      _
    // Predicated region
    $region26: #{tpu_custom_call.1} parent=1 // pred_check
      %p1163 = pneg %p47
    $region27: #{tpu_custom_call.1} parent=1 // pred_check_branch
      %1165 = sbr.rel (%p1163) target = $region29
    $region28: #{tpu_custom_call.1} parent=1 // pred_region
      %v1166 = vld [vmem:[#allocation2] sm:$0xff]
      %v1167 = vld [vmem:[#allocation2 + $0x8] sm:$0xff]
      %v1168 = vld [vmem:[#allocation2 + $0x10] sm:$0xff]
      %v1169 = vld [vmem:[#allocation2 + $0x18] sm:$0xff]
      %v1170 = vld [vmem:[#allocation2 + $0x20] sm:$0xff]
      %v1171 = vld [vmem:[#allocation2 + $0x28] sm:$0xff]
      %v1172 = vld [vmem:[#allocation2 + $0x30] sm:$0xff]
      %v1173 = vld [vmem:[#allocation2 + $0x38] sm:$0xff]
      %v1174 = vld [vmem:[#allocation2 + $0x40] sm:$0xff]
      %v1175 = vld [vmem:[#allocation2 + $0x48] sm:$0xff]
      %v1176 = vld [vmem:[#allocation2 + $0x50] sm:$0xff]
      %v1177 = vld [vmem:[#allocation2 + $0x58] sm:$0xff]
      %v1178 = vld [vmem:[#allocation2 + $0x60] sm:$0xff]
      %v1179 = vld [vmem:[#allocation2 + $0x68] sm:$0xff]
      %v1180 = vld [vmem:[#allocation2 + $0x70] sm:$0xff]
      %v1181 = vld [vmem:[#allocation2 + $0x78] sm:$0xff]
      %v1182 = vld [vmem:[#allocation2 + $0x80] sm:$0xff]
      %v1183 = vld [vmem:[#allocation2 + $0x88] sm:$0xff]
      %v1184 = vld [vmem:[#allocation2 + $0x90] sm:$0xff]
      %v1185 = vld [vmem:[#allocation2 + $0x98] sm:$0xff]
      %v1186 = vld [vmem:[#allocation2 + $0xa0] sm:$0xff]
      %v1187 = vld [vmem:[#allocation2 + $0xa8] sm:$0xff]
      %v1188 = vld [vmem:[#allocation2 + $0xb0] sm:$0xff]
      %v1189 = vld [vmem:[#allocation2 + $0xb8] sm:$0xff]
      %v1190 = vld [vmem:[#allocation2 + $0xc0] sm:$0xff]
      %v1191 = vld [vmem:[#allocation2 + $0xc8] sm:$0xff]
      %v1192 = vld [vmem:[#allocation2 + $0xd0] sm:$0xff]
      %v1193 = vld [vmem:[#allocation2 + $0xd8] sm:$0xff]
      %v1194 = vld [vmem:[#allocation2 + $0xe0] sm:$0xff]
      %v1195 = vld [vmem:[#allocation2 + $0xe8] sm:$0xff]
      %v1196 = vld [vmem:[#allocation2 + $0xf0] sm:$0xff]
      %v1197 = vld [vmem:[#allocation2 + $0xf8] sm:$0xff]
      %v1198 = vld [vmem:[#allocation2 + $0x100] sm:$0xff]
      %v1199 = vld [vmem:[#allocation2 + $0x108] sm:$0xff]
      %v1200 = vld [vmem:[#allocation2 + $0x110] sm:$0xff]
      %v1201 = vld [vmem:[#allocation2 + $0x118] sm:$0xff]
      %v1202 = vld [vmem:[#allocation2 + $0x120] sm:$0xff]
      %v1203 = vld [vmem:[#allocation2 + $0x128] sm:$0xff]
      %v1204 = vld [vmem:[#allocation2 + $0x130] sm:$0xff]
      %v1205 = vld [vmem:[#allocation2 + $0x138] sm:$0xff]
      %v1206 = vld [vmem:[#allocation2 + $0x140] sm:$0xff]
      %v1207 = vld [vmem:[#allocation2 + $0x148] sm:$0xff]
      %v1208 = vld [vmem:[#allocation2 + $0x150] sm:$0xff]
      %v1209 = vld [vmem:[#allocation2 + $0x158] sm:$0xff]
      %v1210 = vld [vmem:[#allocation2 + $0x160] sm:$0xff]
      %v1211 = vld [vmem:[#allocation2 + $0x168] sm:$0xff]
      %v1212 = vld [vmem:[#allocation2 + $0x170] sm:$0xff]
      %v1213 = vld [vmem:[#allocation2 + $0x178] sm:$0xff]
      %v1214 = vld [vmem:[#allocation2 + $0x180] sm:$0xff]
      %v1215 = vld [vmem:[#allocation2 + $0x188] sm:$0xff]
      %v1216 = vld [vmem:[#allocation2 + $0x190] sm:$0xff]
      %v1217 = vld [vmem:[#allocation2 + $0x198] sm:$0xff]
      %v1218 = vld [vmem:[#allocation2 + $0x1a0] sm:$0xff]
      %v1219 = vld [vmem:[#allocation2 + $0x1a8] sm:$0xff]
      %v1220 = vld [vmem:[#allocation2 + $0x1b0] sm:$0xff]
      %v1221 = vld [vmem:[#allocation2 + $0x1b8] sm:$0xff]
      %v1222 = vld [vmem:[#allocation2 + $0x1c0] sm:$0xff]
      %v1223 = vld [vmem:[#allocation2 + $0x1c8] sm:$0xff]
      %v1224 = vld [vmem:[#allocation2 + $0x1d0] sm:$0xff]
      %v1225 = vld [vmem:[#allocation2 + $0x1d8] sm:$0xff]
      %v1226 = vld [vmem:[#allocation2 + $0x1e0] sm:$0xff]
      %v1227 = vld [vmem:[#allocation2 + $0x1e8] sm:$0xff]
      %v1228 = vld [vmem:[#allocation2 + $0x1f0] sm:$0xff]
      %v1229 = vld [vmem:[#allocation2 + $0x1f8] sm:$0xff]
      %v1230 = vpack.c.bf16 %v1166, %v1166
      %v1231 = vpack.c.bf16 %v1167, %v1167
      %v1232 = vpack.c.bf16 %v1168, %v1168
      %v1233 = vpack.c.bf16 %v1169, %v1169
      %v1234 = vpack.c.bf16 %v1170, %v1170
      %v1235 = vpack.c.bf16 %v1171, %v1171
      %v1236 = vpack.c.bf16 %v1172, %v1172
      %v1237 = vpack.c.bf16 %v1173, %v1173
      %v1238 = vpack.c.bf16 %v1174, %v1174
      %v1239 = vpack.c.bf16 %v1175, %v1175
      %v1240 = vpack.c.bf16 %v1176, %v1176
      %v1241 = vpack.c.bf16 %v1177, %v1177
      %v1242 = vpack.c.bf16 %v1178, %v1178
      %v1243 = vpack.c.bf16 %v1179, %v1179
      %v1244 = vpack.c.bf16 %v1180, %v1180
      %v1245 = vpack.c.bf16 %v1181, %v1181
      %v1246 = vpack.c.bf16 %v1182, %v1182
      %v1247 = vpack.c.bf16 %v1183, %v1183
      %v1248 = vpack.c.bf16 %v1184, %v1184
      %v1249 = vpack.c.bf16 %v1185, %v1185
      %v1250 = vpack.c.bf16 %v1186, %v1186
      %v1251 = vpack.c.bf16 %v1187, %v1187
      %v1252 = vpack.c.bf16 %v1188, %v1188
      %v1253 = vpack.c.bf16 %v1189, %v1189
      %v1254 = vpack.c.bf16 %v1190, %v1190
      %v1255 = vpack.c.bf16 %v1191, %v1191
      %v1256 = vpack.c.bf16 %v1192, %v1192
      %v1257 = vpack.c.bf16 %v1193, %v1193
      %v1258 = vpack.c.bf16 %v1194, %v1194
      %v1259 = vpack.c.bf16 %v1195, %v1195
      %v1260 = vpack.c.bf16 %v1196, %v1196
      %v1261 = vpack.c.bf16 %v1197, %v1197
      %v1262 = vpack.c.bf16 %v1198, %v1198
      %v1263 = vpack.c.bf16 %v1199, %v1199
      %v1264 = vpack.c.bf16 %v1200, %v1200
      %v1265 = vpack.c.bf16 %v1201, %v1201
      %v1266 = vpack.c.bf16 %v1202, %v1202
      %v1267 = vpack.c.bf16 %v1203, %v1203
      %v1268 = vpack.c.bf16 %v1204, %v1204
      %v1269 = vpack.c.bf16 %v1205, %v1205
      %v1270 = vpack.c.bf16 %v1206, %v1206
      %v1271 = vpack.c.bf16 %v1207, %v1207
      %v1272 = vpack.c.bf16 %v1208, %v1208
      %v1273 = vpack.c.bf16 %v1209, %v1209
      %v1274 = vpack.c.bf16 %v1210, %v1210
      %v1275 = vpack.c.bf16 %v1211, %v1211
      %v1276 = vpack.c.bf16 %v1212, %v1212
      %v1277 = vpack.c.bf16 %v1213, %v1213
      %v1278 = vpack.c.bf16 %v1214, %v1214
      %v1279 = vpack.c.bf16 %v1215, %v1215
      %v1280 = vpack.c.bf16 %v1216, %v1216
      %v1281 = vpack.c.bf16 %v1217, %v1217
      %v1282 = vpack.c.bf16 %v1218, %v1218
      %v1283 = vpack.c.bf16 %v1219, %v1219
      %v1284 = vpack.c.bf16 %v1220, %v1220
      %v1285 = vpack.c.bf16 %v1221, %v1221
      %v1286 = vpack.c.bf16 %v1222, %v1222
      %v1287 = vpack.c.bf16 %v1223, %v1223
      %v1288 = vpack.c.bf16 %v1224, %v1224
      %v1289 = vpack.c.bf16 %v1225, %v1225
      %v1290 = vpack.c.bf16 %v1226, %v1226
      %v1291 = vpack.c.bf16 %v1227, %v1227
      %v1292 = vpack.c.bf16 %v1228, %v1228
      %v1293 = vpack.c.bf16 %v1229, %v1229
      %1294 = vst [vmem:[#allocation8] sm:$0xf] %v1230
      %1295 = vst [vmem:[#allocation8 + $0x4] sm:$0xf] %v1231
      %1296 = vst [vmem:[#allocation8 + $0x8] sm:$0xf] %v1232
      %1297 = vst [vmem:[#allocation8 + $0xc] sm:$0xf] %v1233
      %1298 = vst [vmem:[#allocation8 + $0x10] sm:$0xf] %v1234
      %1299 = vst [vmem:[#allocation8 + $0x14] sm:$0xf] %v1235
      %1300 = vst [vmem:[#allocation8 + $0x18] sm:$0xf] %v1236
      %1301 = vst [vmem:[#allocation8 + $0x1c] sm:$0xf] %v1237
      %1302 = vst [vmem:[#allocation8 + $0x20] sm:$0xf] %v1238
      %1303 = vst [vmem:[#allocation8 + $0x24] sm:$0xf] %v1239
      %1304 = vst [vmem:[#allocation8 + $0x28] sm:$0xf] %v1240
      %1305 = vst [vmem:[#allocation8 + $0x2c] sm:$0xf] %v1241
      %1306 = vst [vmem:[#allocation8 + $0x30] sm:$0xf] %v1242
      %1307 = vst [vmem:[#allocation8 + $0x34] sm:$0xf] %v1243
      %1308 = vst [vmem:[#allocation8 + $0x38] sm:$0xf] %v1244
      %1309 = vst [vmem:[#allocation8 + $0x3c] sm:$0xf] %v1245
      %1310 = vst [vmem:[#allocation8 + $0x40] sm:$0xf] %v1246
      %1311 = vst [vmem:[#allocation8 + $0x44] sm:$0xf] %v1247
      %1312 = vst [vmem:[#allocation8 + $0x48] sm:$0xf] %v1248
      %1313 = vst [vmem:[#allocation8 + $0x4c] sm:$0xf] %v1249
      %1314 = vst [vmem:[#allocation8 + $0x50] sm:$0xf] %v1250
      %1315 = vst [vmem:[#allocation8 + $0x54] sm:$0xf] %v1251
      %1316 = vst [vmem:[#allocation8 + $0x58] sm:$0xf] %v1252
      %1317 = vst [vmem:[#allocation8 + $0x5c] sm:$0xf] %v1253
      %1318 = vst [vmem:[#allocation8 + $0x60] sm:$0xf] %v1254
      %1319 = vst [vmem:[#allocation8 + $0x64] sm:$0xf] %v1255
      %1320 = vst [vmem:[#allocation8 + $0x68] sm:$0xf] %v1256
      %1321 = vst [vmem:[#allocation8 + $0x6c] sm:$0xf] %v1257
      %1322 = vst [vmem:[#allocation8 + $0x70] sm:$0xf] %v1258
      %1323 = vst [vmem:[#allocation8 + $0x74] sm:$0xf] %v1259
      %1324 = vst [vmem:[#allocation8 + $0x78] sm:$0xf] %v1260
      %1325 = vst [vmem:[#allocation8 + $0x7c] sm:$0xf] %v1261
      %1326 = vst [vmem:[#allocation8 + $0x80] sm:$0xf] %v1262
      %1327 = vst [vmem:[#allocation8 + $0x84] sm:$0xf] %v1263
      %1328 = vst [vmem:[#allocation8 + $0x88] sm:$0xf] %v1264
      %1329 = vst [vmem:[#allocation8 + $0x8c] sm:$0xf] %v1265
      %1330 = vst [vmem:[#allocation8 + $0x90] sm:$0xf] %v1266
      %1331 = vst [vmem:[#allocation8 + $0x94] sm:$0xf] %v1267
      %1332 = vst [vmem:[#allocation8 + $0x98] sm:$0xf] %v1268
      %1333 = vst [vmem:[#allocation8 + $0x9c] sm:$0xf] %v1269
      %1334 = vst [vmem:[#allocation8 + $0xa0] sm:$0xf] %v1270
      %1335 = vst [vmem:[#allocation8 + $0xa4] sm:$0xf] %v1271
      %1336 = vst [vmem:[#allocation8 + $0xa8] sm:$0xf] %v1272
      %1337 = vst [vmem:[#allocation8 + $0xac] sm:$0xf] %v1273
      %1338 = vst [vmem:[#allocation8 + $0xb0] sm:$0xf] %v1274
      %1339 = vst [vmem:[#allocation8 + $0xb4] sm:$0xf] %v1275
      %1340 = vst [vmem:[#allocation8 + $0xb8] sm:$0xf] %v1276
      %1341 = vst [vmem:[#allocation8 + $0xbc] sm:$0xf] %v1277
      %1342 = vst [vmem:[#allocation8 + $0xc0] sm:$0xf] %v1278
      %1343 = vst [vmem:[#allocation8 + $0xc4] sm:$0xf] %v1279
      %1344 = vst [vmem:[#allocation8 + $0xc8] sm:$0xf] %v1280
      %1345 = vst [vmem:[#allocation8 + $0xcc] sm:$0xf] %v1281
      %1346 = vst [vmem:[#allocation8 + $0xd0] sm:$0xf] %v1282
      %1347 = vst [vmem:[#allocation8 + $0xd4] sm:$0xf] %v1283
      %1348 = vst [vmem:[#allocation8 + $0xd8] sm:$0xf] %v1284
      %1349 = vst [vmem:[#allocation8 + $0xdc] sm:$0xf] %v1285
      %1350 = vst [vmem:[#allocation8 + $0xe0] sm:$0xf] %v1286
      %1351 = vst [vmem:[#allocation8 + $0xe4] sm:$0xf] %v1287
      %1352 = vst [vmem:[#allocation8 + $0xe8] sm:$0xf] %v1288
      %1353 = vst [vmem:[#allocation8 + $0xec] sm:$0xf] %v1289
      %1354 = vst [vmem:[#allocation8 + $0xf0] sm:$0xf] %v1290
      %1355 = vst [vmem:[#allocation8 + $0xf4] sm:$0xf] %v1291
      %1356 = vst [vmem:[#allocation8 + $0xf8] sm:$0xf] %v1292
      %1357 = vst [vmem:[#allocation8 + $0xfc] sm:$0xf] %v1293
      %v1358 = vld [vmem:[#allocation9] sm:$0x1]
      %v1359 = vadd.f32 %v1166, %v1167
      %v1360 = vadd.f32 %v1359, %v1168
      %v1361 = vadd.f32 %v1360, %v1169
      %v1362 = vadd.f32 %v1361, %v1170
      %v1363 = vadd.f32 %v1362, %v1171
      %v1364 = vadd.f32 %v1363, %v1172
      %v1365 = vadd.f32 %v1364, %v1173
      %v1366 = vadd.f32 %v1365, %v1174
      %v1367 = vadd.f32 %v1366, %v1175
      %v1368 = vadd.f32 %v1367, %v1176
      %v1369 = vadd.f32 %v1368, %v1177
      %v1370 = vadd.f32 %v1369, %v1178
      %v1371 = vadd.f32 %v1370, %v1179
      %v1372 = vadd.f32 %v1371, %v1180
      %v1373 = vadd.f32 %v1372, %v1181
      %v1374 = vadd.f32 %v1373, %v1182
      %v1375 = vadd.f32 %v1374, %v1183
      %v1376 = vadd.f32 %v1375, %v1184
      %v1377 = vadd.f32 %v1376, %v1185
      %v1378 = vadd.f32 %v1377, %v1186
      %v1379 = vadd.f32 %v1378, %v1187
      %v1380 = vadd.f32 %v1379, %v1188
      %v1381 = vadd.f32 %v1380, %v1189
      %v1382 = vadd.f32 %v1381, %v1190
      %v1383 = vadd.f32 %v1382, %v1191
      %v1384 = vadd.f32 %v1383, %v1192
      %v1385 = vadd.f32 %v1384, %v1193
      %v1386 = vadd.f32 %v1385, %v1194
      %v1387 = vadd.f32 %v1386, %v1195
      %v1388 = vadd.f32 %v1387, %v1196
      %v1389 = vadd.f32 %v1388, %v1197
      %v1390 = vadd.f32 %v1389, %v1198
      %v1391 = vadd.f32 %v1390, %v1199
      %v1392 = vadd.f32 %v1391, %v1200
      %v1393 = vadd.f32 %v1392, %v1201
      %v1394 = vadd.f32 %v1393, %v1202
      %v1395 = vadd.f32 %v1394, %v1203
      %v1396 = vadd.f32 %v1395, %v1204
      %v1397 = vadd.f32 %v1396, %v1205
      %v1398 = vadd.f32 %v1397, %v1206
      %v1399 = vadd.f32 %v1398, %v1207
      %v1400 = vadd.f32 %v1399, %v1208
      %v1401 = vadd.f32 %v1400, %v1209
      %v1402 = vadd.f32 %v1401, %v1210
      %v1403 = vadd.f32 %v1402, %v1211
      %v1404 = vadd.f32 %v1403, %v1212
      %v1405 = vadd.f32 %v1404, %v1213
      %v1406 = vadd.f32 %v1405, %v1214
      %v1407 = vadd.f32 %v1406, %v1215
      %v1408 = vadd.f32 %v1407, %v1216
      %v1409 = vadd.f32 %v1408, %v1217
      %v1410 = vadd.f32 %v1409, %v1218
      %v1411 = vadd.f32 %v1410, %v1219
      %v1412 = vadd.f32 %v1411, %v1220
      %v1413 = vadd.f32 %v1412, %v1221
      %v1414 = vadd.f32 %v1413, %v1222
      %v1415 = vadd.f32 %v1414, %v1223
      %v1416 = vadd.f32 %v1415, %v1224
      %v1417 = vadd.f32 %v1416, %v1225
      %v1418 = vadd.f32 %v1417, %v1226
      %v1419 = vadd.f32 %v1418, %v1227
      %v1420 = vadd.f32 %v1419, %v1228
      %v1421 = vadd.f32 %v1420, %v1229
      %v1422 = vrot.slane %v1421, 4
      %v1423 = vadd.f32 %v1421, %v1422
      %v1424 = vrot.slane %v1423, 2
      %v1425 = vadd.f32 %v1423, %v1424
      %v1426 = vrot.slane %v1425, 1
      %v1427 = vadd.f32 %v1425, %v1426
      %v1428 = vadd.f32 %v1358, %v1427
      %1429 = vst [vmem:[#allocation9] sm:$0x1] %v1428
      %v1430 = vld [vmem:[#allocation9 + $0x1] sm:$0x1]
      %v1431 = vmul.f32 %v1166, %v1166
      %v1432 = vmul.f32 %v1167, %v1167
      %v1433 = vmul.f32 %v1168, %v1168
      %v1434 = vmul.f32 %v1169, %v1169
      %v1435 = vmul.f32 %v1170, %v1170
      %v1436 = vmul.f32 %v1171, %v1171
      %v1437 = vmul.f32 %v1172, %v1172
      %v1438 = vmul.f32 %v1173, %v1173
      %v1439 = vmul.f32 %v1174, %v1174
      %v1440 = vmul.f32 %v1175, %v1175
      %v1441 = vmul.f32 %v1176, %v1176
      %v1442 = vmul.f32 %v1177, %v1177
      %v1443 = vmul.f32 %v1178, %v1178
      %v1444 = vmul.f32 %v1179, %v1179
      %v1445 = vmul.f32 %v1180, %v1180
      %v1446 = vmul.f32 %v1181, %v1181
      %v1447 = vmul.f32 %v1182, %v1182
      %v1448 = vmul.f32 %v1183, %v1183
      %v1449 = vmul.f32 %v1184, %v1184
      %v1450 = vmul.f32 %v1185, %v1185
      %v1451 = vmul.f32 %v1186, %v1186
      %v1452 = vmul.f32 %v1187, %v1187
      %v1453 = vmul.f32 %v1188, %v1188
      %v1454 = vmul.f32 %v1189, %v1189
      %v1455 = vmul.f32 %v1190, %v1190
      %v1456 = vmul.f32 %v1191, %v1191
      %v1457 = vmul.f32 %v1192, %v1192
      %v1458 = vmul.f32 %v1193, %v1193
      %v1459 = vmul.f32 %v1194, %v1194
      %v1460 = vmul.f32 %v1195, %v1195
      %v1461 = vmul.f32 %v1196, %v1196
      %v1462 = vmul.f32 %v1197, %v1197
      %v1463 = vmul.f32 %v1198, %v1198
      %v1464 = vmul.f32 %v1199, %v1199
      %v1465 = vmul.f32 %v1200, %v1200
      %v1466 = vmul.f32 %v1201, %v1201
      %v1467 = vmul.f32 %v1202, %v1202
      %v1468 = vmul.f32 %v1203, %v1203
      %v1469 = vmul.f32 %v1204, %v1204
      %v1470 = vmul.f32 %v1205, %v1205
      %v1471 = vmul.f32 %v1206, %v1206
      %v1472 = vmul.f32 %v1207, %v1207
      %v1473 = vmul.f32 %v1208, %v1208
      %v1474 = vmul.f32 %v1209, %v1209
      %v1475 = vmul.f32 %v1210, %v1210
      %v1476 = vmul.f32 %v1211, %v1211
      %v1477 = vmul.f32 %v1212, %v1212
      %v1478 = vmul.f32 %v1213, %v1213
      %v1479 = vmul.f32 %v1214, %v1214
      %v1480 = vmul.f32 %v1215, %v1215
      %v1481 = vmul.f32 %v1216, %v1216
      %v1482 = vmul.f32 %v1217, %v1217
      %v1483 = vmul.f32 %v1218, %v1218
      %v1484 = vmul.f32 %v1219, %v1219
      %v1485 = vmul.f32 %v1220, %v1220
      %v1486 = vmul.f32 %v1221, %v1221
      %v1487 = vmul.f32 %v1222, %v1222
      %v1488 = vmul.f32 %v1223, %v1223
      %v1489 = vmul.f32 %v1224, %v1224
      %v1490 = vmul.f32 %v1225, %v1225
      %v1491 = vmul.f32 %v1226, %v1226
      %v1492 = vmul.f32 %v1227, %v1227
      %v1493 = vmul.f32 %v1228, %v1228
      %v1494 = vmul.f32 %v1229, %v1229
      %v1495 = vadd.f32 %v1431, %v1432
      %v1496 = vadd.f32 %v1495, %v1433
      %v1497 = vadd.f32 %v1496, %v1434
      %v1498 = vadd.f32 %v1497, %v1435
      %v1499 = vadd.f32 %v1498, %v1436
      %v1500 = vadd.f32 %v1499, %v1437
      %v1501 = vadd.f32 %v1500, %v1438
      %v1502 = vadd.f32 %v1501, %v1439
      %v1503 = vadd.f32 %v1502, %v1440
      %v1504 = vadd.f32 %v1503, %v1441
      %v1505 = vadd.f32 %v1504, %v1442
      %v1506 = vadd.f32 %v1505, %v1443
      %v1507 = vadd.f32 %v1506, %v1444
      %v1508 = vadd.f32 %v1507, %v1445
      %v1509 = vadd.f32 %v1508, %v1446
      %v1510 = vadd.f32 %v1509, %v1447
      %v1511 = vadd.f32 %v1510, %v1448
      %v1512 = vadd.f32 %v1511, %v1449
      %v1513 = vadd.f32 %v1512, %v1450
      %v1514 = vadd.f32 %v1513, %v1451
      %v1515 = vadd.f32 %v1514, %v1452
      %v1516 = vadd.f32 %v1515, %v1453
      %v1517 = vadd.f32 %v1516, %v1454
      %v1518 = vadd.f32 %v1517, %v1455
      %v1519 = vadd.f32 %v1518, %v1456
      %v1520 = vadd.f32 %v1519, %v1457
      %v1521 = vadd.f32 %v1520, %v1458
      %v1522 = vadd.f32 %v1521, %v1459
      %v1523 = vadd.f32 %v1522, %v1460
      %v1524 = vadd.f32 %v1523, %v1461
      %v1525 = vadd.f32 %v1524, %v1462
      %v1526 = vadd.f32 %v1525, %v1463
      %v1527 = vadd.f32 %v1526, %v1464
      %v1528 = vadd.f32 %v1527, %v1465
      %v1529 = vadd.f32 %v1528, %v1466
      %v1530 = vadd.f32 %v1529, %v1467
      %v1531 = vadd.f32 %v1530, %v1468
      %v1532 = vadd.f32 %v1531, %v1469
      %v1533 = vadd.f32 %v1532, %v1470
      %v1534 = vadd.f32 %v1533, %v1471
      %v1535 = vadd.f32 %v1534, %v1472
      %v1536 = vadd.f32 %v1535, %v1473
      %v1537 = vadd.f32 %v1536, %v1474
      %v1538 = vadd.f32 %v1537, %v1475
      %v1539 = vadd.f32 %v1538, %v1476
      %v1540 = vadd.f32 %v1539, %v1477
      %v1541 = vadd.f32 %v1540, %v1478
      %v1542 = vadd.f32 %v1541, %v1479
      %v1543 = vadd.f32 %v1542, %v1480
      %v1544 = vadd.f32 %v1543, %v1481
      %v1545 = vadd.f32 %v1544, %v1482
      %v1546 = vadd.f32 %v1545, %v1483
      %v1547 = vadd.f32 %v1546, %v1484
      %v1548 = vadd.f32 %v1547, %v1485
      %v1549 = vadd.f32 %v1548, %v1486
      %v1550 = vadd.f32 %v1549, %v1487
      %v1551 = vadd.f32 %v1550, %v1488
      %v1552 = vadd.f32 %v1551, %v1489
      %v1553 = vadd.f32 %v1552, %v1490
      %v1554 = vadd.f32 %v1553, %v1491
      %v1555 = vadd.f32 %v1554, %v1492
      %v1556 = vadd.f32 %v1555, %v1493
      %v1557 = vadd.f32 %v1556, %v1494
      %v1558 = vrot.slane %v1557, 4
      %v1559 = vadd.f32 %v1557, %v1558
      %v1560 = vrot.slane %v1559, 2
      %v1561 = vadd.f32 %v1559, %v1560
      %v1562 = vrot.slane %v1561, 1
      %v1563 = vadd.f32 %v1561, %v1562
      %v1564 = vadd.f32 %v1430, %v1563
      %1565 = vst [vmem:[#allocation9 + $0x1] sm:$0x1] %v1564
    $region29: #{tpu_custom_call.1} parent=1 // pred_fallthru
      _
    // Predicated region
    $region30: #{tpu_custom_call.1} parent=1 // pred_check
      _
    $region31: #{tpu_custom_call.1} parent=1 // pred_check_branch
      %1567 = sbr.rel (0) target = $region33
    $region32: #{tpu_custom_call.1} parent=1 // pred_region
      %1569 = vsyncadd [#allocation5], 0
      %s1570 = sshll.u32 [#allocation8], 4
      %s1571 = int_to_ptr.vmem [resolvable:$true] %s1570
      %s1572 = sshll.u32 %s2, 4
      %s1573 = int_to_ptr.hbm [resolvable:$true] %s1572
      %1578 = dma.vmem_to_hbm [thread:$0]  %s1571, 4096, %s1573, [#allocation5], 64, 64, 4
    $region33: #{tpu_custom_call.1} parent=1 // pred_fallthru
      _
    // Predicated region
    $region34: #{tpu_custom_call.1} parent=1 // pred_check
      _
    $region35: #{tpu_custom_call.1} parent=1 // pred_check_branch
      %1580 = sbr.rel (0) target = $region37
    $region36: #{tpu_custom_call.1} parent=1 // pred_region
      %1582 = vsyncadd [#allocation10], 0
      %s1584 = sshll.u32 [#allocation9], 4
      %s1585 = int_to_ptr.vmem [resolvable:$true] %s1584
      %s1586 = sshll.u32 %s3, 4
      %s1587 = int_to_ptr.hbm [resolvable:$true] %s1586
      %1589 = dma.vmem_to_hbm [thread:$0]  %s1585, 128, %s1587, [#allocation10]
    $region37: #{tpu_custom_call.1} parent=1 // pred_fallthru
      _
    // Predicated region
    $region38: #{tpu_custom_call.1} parent=1 // pred_check
      _
    $region39: #{tpu_custom_call.1} parent=1 // pred_check_branch
      %1591 = sbr.rel (0) target = $region41
    $region40: #{tpu_custom_call.1} parent=1 // pred_region
      %1593 = dma.done [#allocation5], 4096
    $region41: #{tpu_custom_call.1} parent=1 // pred_fallthru
      _
    // Predicated region
    $region42: #{tpu_custom_call.1} parent=1 // pred_check
      _
    $region43: #{tpu_custom_call.1} parent=1 // pred_check_branch
      %1595 = sbr.rel (0) target = $region45
    $region44: #{tpu_custom_call.1} parent=1 // pred_region
      %1597 = dma.done [#allocation10], 128
    $region45: #{tpu_custom_call.1} parent=1 // pred_fallthru
      _
    %1598 = vsyncpa [#allocation4], 1
    %1599 = vsyncpa [#allocation7], 1
    %1600 = vsyncpa [#allocation5], 1
    %1601 = vsyncpa [#allocation10], 1

</llo_original>
